<compile_context>
chip_gen: v6e
topology: v6e:2x2x1
jax: 0.10.0
libtpu: 0.0.40
codegen_flags: <defaults>
</compile_context>

<pallas_src>
import jax
import jax.numpy as jnp
import numpy as np
from jax.experimental import pallas as pl
from jax.experimental.pallas import tpu as pltpu


def transition_predictor_kernel(
    x_ref,                       # (T*B, D) f32, time-major flattened dials
    wihp_ref, whhp_ref, bp_ref,  # (D, 4D), (D, 4D), (1, 4D); gate order i,f,g,o
    keep_ref,                    # (B, 1) f32, (length >= T) mask
    resp_ref,                    # (B, D)
    wd1h_ref, d1r_ref, b1_ref,   # (D, Hp), (D, Hp), (1, Hp)  [Hp = padded 128]
    d2_ref, b2_ref,              # (Hp, 1), (1, 1)
    out_ref):                    # (B, 1)
    B = out_ref.shape[0]
    TB, D = x_ref.shape
    T = TB // B
    G = 4 * D

    # ---- hoisted input projection: ONE (T*B, D) @ (D, 4D) matmul + bias ----
    px = (jnp.dot(x_ref[...], wihp_ref[...], preferred_element_type=jnp.float32)
          + bp_ref[...]).reshape(T, B, G)          # time-major: px[t] is (B, 4D)

    whhp = whhp_ref[...]                           # load recurrent weights once

    # ---- serial LSTM recurrence (statically unrolled, packed gates) ----
    h = jnp.zeros((B, D), jnp.float32)
    c = jnp.zeros((B, D), jnp.float32)
    for t in range(T):
        z = px[t] + jnp.dot(h, whhp, preferred_element_type=jnp.float32)  # (B, 4D)
        sg = jax.nn.sigmoid(z)                     # one EUP pass over 128 lanes
        th = jnp.tanh(z)                           # one EUP pass over 128 lanes
        gi = sg[:, 0:D]
        gf = sg[:, D:2 * D]
        gg = th[:, 2 * D:3 * D]
        go = sg[:, 3 * D:4 * D]
        c = gf * c + gi * gg
        h = go * jnp.tanh(c)

    # ---- pad_packed semantics: keep row b iff length[b] >= T, else zero ----
    h_last = h * keep_ref[...]                     # (B, D) * (B, 1) broadcast

    # ---- epilogue (W already folded into wd1h): MLP + sigmoid ----
    z1 = (jnp.dot(h_last, wd1h_ref[...], preferred_element_type=jnp.float32)
          + jnp.dot(resp_ref[...], d1r_ref[...], preferred_element_type=jnp.float32)
          + b1_ref[...])
    z1 = jnp.maximum(z1, 0.0)                      # ReLU, lane-dense (B, 128)
    z2 = jnp.dot(z1, d2_ref[...], preferred_element_type=jnp.float32) + b2_ref[...]
    out_ref[...] = jax.nn.sigmoid(z2)


def transition_predictor(dials, dial_length, response, params):
    B, T, D = dials.shape
    lens = jnp.asarray(dial_length, jnp.int32).reshape(B)

    # Zero padded timesteps so non-finite padding cannot poison the recurrence
    # (rows with length < T are zero-masked at the end anyway -> same result).
    tmask = (jnp.arange(T, dtype=jnp.int32)[None, :] < lens[:, None]).astype(dials.dtype)
    dials = dials * tmask[:, :, None]

    # Time-major contiguous layout: each step reads a leading-axis (B, 4D) slab.
    x_tm = jnp.transpose(dials, (1, 0, 2)).reshape(T * B, D)

    keep = (lens >= T).astype(jnp.float32).reshape(B, 1)   # pad_packed keep mask
    resp = response.reshape(B, D)

    # Pack per-gate LSTM weights along the lane axis (gate order i, f, g, o).
    wihp = jnp.concatenate([params["wih"][g] for g in range(4)], axis=1)  # (D, 4D)
    whhp = jnp.concatenate([params["whh"][g] for g in range(4)], axis=1)  # (D, 4D)
    bp = jnp.concatenate([params["b"][g] for g in range(4)], axis=1)      # (1, 4D)

    # Fold W into the first MLP layer and zero-pad the hidden dim to 128 lanes.
    H = params["d1h"].shape[1]
    Hp = max(128, ((H + 127) // 128) * 128)
    pad_c = lambda a: jnp.pad(a, ((0, 0), (0, Hp - H)))
    wd1h = pad_c(params["W"] @ params["d1h"])                 # (D, Hp)
    d1r = pad_c(params["d1r"])                                # (D, Hp)
    b1 = pad_c(params["b1"])                                  # (1, Hp)
    d2 = jnp.pad(params["d2"], ((0, Hp - H), (0, 0)))         # (Hp, 1)

    in_arrays = [x_tm, wihp, whhp, bp, keep, resp, wd1h, d1r, b1, d2, params["b2"]]

    def full(arr):
        n = arr.ndim
        return pl.BlockSpec(arr.shape, lambda *_: (0,) * n)

    return pl.pallas_call(
        transition_predictor_kernel,
        out_shape=jax.ShapeDtypeStruct((B, 1), jnp.float32),
        grid_spec=pltpu.PrefetchScalarGridSpec(
            num_scalar_prefetch=0,
            grid=(1,),                                   # single fused invocation
            in_specs=[full(a) for a in in_arrays],
            out_specs=pl.BlockSpec((B, 1), lambda i: (0, 0)),
        ),
        compiler_params=pltpu.CompilerParams(
            dimension_semantics=("arbitrary",)),
    )(*in_arrays)


def reference(dials, dial_length, response, params):
    """Pure-JAX reference reproducing the PyTorch forward semantics."""
    B, T, D = dials.shape
    lens = jnp.asarray(dial_length, jnp.int32)
    wih, whh, b = params["wih"], params["whh"], params["b"]

    def step(carry, x_t):
        h, c = carry
        i = jax.nn.sigmoid(x_t @ wih[0] + h @ whh[0] + b[0])
        f = jax.nn.sigmoid(x_t @ wih[1] + h @ whh[1] + b[1])
        g = jnp.tanh(x_t @ wih[2] + h @ whh[2] + b[2])
        o = jax.nn.sigmoid(x_t @ wih[3] + h @ whh[3] + b[3])
        c = f * c + i * g
        h = o * jnp.tanh(c)
        return (h, c), h

    (_, _), hs = jax.lax.scan(
        step,
        (jnp.zeros((B, D), jnp.float32), jnp.zeros((B, D), jnp.float32)),
        jnp.transpose(dials, (1, 0, 2)))
    h_last = hs[-1] * (lens[:, None] >= T).astype(jnp.float32)
    hidden = h_last @ params["W"]
    rep = jnp.concatenate([hidden, response[:, 0, :]], axis=1)
    d1 = jnp.concatenate([params["d1h"], params["d1r"]], axis=0)
    z1 = jnp.maximum(rep @ d1 + params["b1"], 0.0)
    return jax.nn.sigmoid(z1 @ params["d2"] + params["b2"])


if __name__ == "__main__":
    # args.downsample -> dim = args.down_dim = 32 (small, synthetic).
    B, T, D = 2, 8, 32
    key = jax.random.PRNGKey(0)
    ks = jax.random.split(key, 12)
    scale = 0.1
    params = {
        # per-gate stacked LSTM weights, gate order i, f, g, o; stored (in, out)
        "wih": jax.random.normal(ks[0], (4, D, D), jnp.float32) * scale,
        "whh": jax.random.normal(ks[1], (4, D, D), jnp.float32) * scale,
        "b":   jax.random.normal(ks[2], (4, 1, D), jnp.float32) * scale,   # b_ih+b_hh
        "W":   jax.random.normal(ks[3], (D, D), jnp.float32) * (6.0 / (2 * D)) ** 0.5,
        "d1h": jax.random.normal(ks[4], (D, 100), jnp.float32) * scale,    # L1, hidden half
        "d1r": jax.random.normal(ks[5], (D, 100), jnp.float32) * scale,    # L1, response half
        "b1":  jax.random.normal(ks[6], (1, 100), jnp.float32) * scale,
        "d2":  jax.random.normal(ks[7], (100, 1), jnp.float32) * scale,
        "b2":  jax.random.normal(ks[8], (1, 1), jnp.float32) * scale,
    }
    dials = jax.random.normal(ks[9], (B, T, D), jnp.float32)
    response = jax.random.normal(ks[10], (B, 1, D), jnp.float32)
    dial_length = [T, 5]   # max length == T (required by the PyTorch assignment)

    out = transition_predictor(dials, dial_length, response, params)
    out = jax.block_until_ready(out)
    assert out.shape == (B, 1)

    ref = reference(dials, dial_length, response, params)
    np.testing.assert_allclose(np.asarray(out), np.asarray(ref),
                               atol=1e-5, rtol=1e-5)
    print("KERNEL_OK")
</pallas_src>

<mosaic_0001>
module attributes {stable_mosaic.version = 11 : i64} {
  func.func @transition_predictor_kernel(%arg0: i32, %arg1: memref<16x32xf32, #tpu.memory_space<vmem>>, %arg2: memref<32x128xf32, #tpu.memory_space<vmem>>, %arg3: memref<32x128xf32, #tpu.memory_space<vmem>>, %arg4: memref<1x128xf32, #tpu.memory_space<vmem>>, %arg5: memref<2x1xf32, #tpu.memory_space<vmem>>, %arg6: memref<2x32xf32, #tpu.memory_space<vmem>>, %arg7: memref<32x128xf32, #tpu.memory_space<vmem>>, %arg8: memref<32x128xf32, #tpu.memory_space<vmem>>, %arg9: memref<1x128xf32, #tpu.memory_space<vmem>>, %arg10: memref<128x1xf32, #tpu.memory_space<vmem>>, %arg11: memref<1x1xf32, #tpu.memory_space<vmem>>, %arg12: memref<2x1xf32, #tpu.memory_space<vmem>>) attributes {dimension_semantics = [#tpu.dimension_semantics<arbitrary>], iteration_bounds = array<i64: 1>, scalar_prefetch = 0 : i64, scratch_operands = 0 : i64, tpu.core_type = #tpu.core_type<tc>, window_params = [{pipeline_mode = #tpu.pipeline_mode<synchronous>, transform_indices = @transform_0, window_bounds = array<i64: 16, 32>}, {pipeline_mode = #tpu.pipeline_mode<synchronous>, transform_indices = @transform_1, window_bounds = array<i64: 32, 128>}, {pipeline_mode = #tpu.pipeline_mode<synchronous>, transform_indices = @transform_2, window_bounds = array<i64: 32, 128>}, {pipeline_mode = #tpu.pipeline_mode<synchronous>, transform_indices = @transform_3, window_bounds = array<i64: 1, 128>}, {pipeline_mode = #tpu.pipeline_mode<synchronous>, transform_indices = @transform_4, window_bounds = array<i64: 2, 1>}, {pipeline_mode = #tpu.pipeline_mode<synchronous>, transform_indices = @transform_5, window_bounds = array<i64: 2, 32>}, {pipeline_mode = #tpu.pipeline_mode<synchronous>, transform_indices = @transform_6, window_bounds = array<i64: 32, 128>}, {pipeline_mode = #tpu.pipeline_mode<synchronous>, transform_indices = @transform_7, window_bounds = array<i64: 32, 128>}, {pipeline_mode = #tpu.pipeline_mode<synchronous>, transform_indices = @transform_8, window_bounds = array<i64: 1, 128>}, {pipeline_mode = #tpu.pipeline_mode<synchronous>, transform_indices = @transform_9, window_bounds = array<i64: 128, 1>}, {pipeline_mode = #tpu.pipeline_mode<synchronous>, transform_indices = @transform_10, window_bounds = array<i64: 1, 1>}, {pipeline_mode = #tpu.pipeline_mode<synchronous>, transform_indices = @transform_11, window_bounds = array<i64: 2, 1>}]} {
    %c0 = arith.constant 0 : index
    %c0_0 = arith.constant 0 : index
    %0 = vector.load %arg1[%c0, %c0_0] : memref<16x32xf32, #tpu.memory_space<vmem>>, vector<16x32xf32>
    %c0_1 = arith.constant 0 : index
    %c0_2 = arith.constant 0 : index
    %1 = vector.load %arg2[%c0_1, %c0_2] : memref<32x128xf32, #tpu.memory_space<vmem>>, vector<32x128xf32>
    %cst = arith.constant dense<0.000000e+00> : vector<16x128xf32>
    %2 = tpu.matmul %0, %1, %cst {dimension_numbers = #tpu.dot_dimension_numbers<[1], [0], [0], [1], [0, 0, 1, 1], [], []>} : vector<16x32xf32>, vector<32x128xf32>, vector<16x128xf32> -> vector<16x128xf32>
    %c0_3 = arith.constant 0 : index
    %c0_4 = arith.constant 0 : index
    %3 = vector.load %arg4[%c0_3, %c0_4] : memref<1x128xf32, #tpu.memory_space<vmem>>, vector<1x128xf32>
    %4 = vector.broadcast %3 : vector<1x128xf32> to vector<16x128xf32>
    %5 = arith.addf %2, %4 : vector<16x128xf32>
    %6 = vector.shape_cast %5 : vector<16x128xf32> to vector<8x2x128xf32>
    %c0_5 = arith.constant 0 : index
    %c0_6 = arith.constant 0 : index
    %7 = vector.load %arg3[%c0_5, %c0_6] : memref<32x128xf32, #tpu.memory_space<vmem>>, vector<32x128xf32>
    %cst_7 = arith.constant 0.000000e+00 : f32
    %8 = vector.broadcast %cst_7 : f32 to vector<2x32xf32>
    %cst_8 = arith.constant 0.000000e+00 : f32
    %9 = vector.broadcast %cst_8 : f32 to vector<2x32xf32>
    %10 = vector.extract_strided_slice %6 {offsets = [0, 0, 0], sizes = [1, 2, 128], strides = [1, 1, 1]} : vector<8x2x128xf32> to vector<1x2x128xf32>
    %11 = vector.shape_cast %10 : vector<1x2x128xf32> to vector<2x128xf32>
    %cst_9 = arith.constant dense<0.000000e+00> : vector<2x128xf32>
    %12 = tpu.matmul %8, %7, %cst_9 {dimension_numbers = #tpu.dot_dimension_numbers<[1], [0], [0], [1], [0, 0, 1, 1], [], []>} : vector<2x32xf32>, vector<32x128xf32>, vector<2x128xf32> -> vector<2x128xf32>
    %13 = arith.addf %11, %12 : vector<2x128xf32>
    %14 = arith.negf %13 : vector<2x128xf32>
    %15 = math.exp %14 : vector<2x128xf32>
    %cst_10 = arith.constant 1.000000e+00 : f32
    %16 = vector.broadcast %cst_10 : f32 to vector<2x128xf32>
    %17 = arith.addf %16, %15 : vector<2x128xf32>
    %18 = arith.divf %16, %17 : vector<2x128xf32>
    %19 = math.tanh %13 : vector<2x128xf32>
    %20 = vector.extract_strided_slice %18 {offsets = [0, 0], sizes = [2, 32], strides = [1, 1]} : vector<2x128xf32> to vector<2x32xf32>
    %21 = vector.extract_strided_slice %18 {offsets = [0, 32], sizes = [2, 32], strides = [1, 1]} : vector<2x128xf32> to vector<2x32xf32>
    %22 = vector.extract_strided_slice %19 {offsets = [0, 64], sizes = [2, 32], strides = [1, 1]} : vector<2x128xf32> to vector<2x32xf32>
    %23 = vector.extract_strided_slice %18 {offsets = [0, 96], sizes = [2, 32], strides = [1, 1]} : vector<2x128xf32> to vector<2x32xf32>
    %24 = arith.mulf %21, %9 : vector<2x32xf32>
    %25 = arith.mulf %20, %22 : vector<2x32xf32>
    %26 = arith.addf %24, %25 : vector<2x32xf32>
    %27 = math.tanh %26 : vector<2x32xf32>
    %28 = arith.mulf %23, %27 : vector<2x32xf32>
    %29 = vector.extract_strided_slice %6 {offsets = [1, 0, 0], sizes = [1, 2, 128], strides = [1, 1, 1]} : vector<8x2x128xf32> to vector<1x2x128xf32>
    %30 = vector.shape_cast %29 : vector<1x2x128xf32> to vector<2x128xf32>
    %cst_11 = arith.constant dense<0.000000e+00> : vector<2x128xf32>
    %31 = tpu.matmul %28, %7, %cst_11 {dimension_numbers = #tpu.dot_dimension_numbers<[1], [0], [0], [1], [0, 0, 1, 1], [], []>} : vector<2x32xf32>, vector<32x128xf32>, vector<2x128xf32> -> vector<2x128xf32>
    %32 = arith.addf %30, %31 : vector<2x128xf32>
    %33 = arith.negf %32 : vector<2x128xf32>
    %34 = math.exp %33 : vector<2x128xf32>
    %cst_12 = arith.constant 1.000000e+00 : f32
    %35 = vector.broadcast %cst_12 : f32 to vector<2x128xf32>
    %36 = arith.addf %35, %34 : vector<2x128xf32>
    %37 = arith.divf %35, %36 : vector<2x128xf32>
    %38 = math.tanh %32 : vector<2x128xf32>
    %39 = vector.extract_strided_slice %37 {offsets = [0, 0], sizes = [2, 32], strides = [1, 1]} : vector<2x128xf32> to vector<2x32xf32>
    %40 = vector.extract_strided_slice %37 {offsets = [0, 32], sizes = [2, 32], strides = [1, 1]} : vector<2x128xf32> to vector<2x32xf32>
    %41 = vector.extract_strided_slice %38 {offsets = [0, 64], sizes = [2, 32], strides = [1, 1]} : vector<2x128xf32> to vector<2x32xf32>
    %42 = vector.extract_strided_slice %37 {offsets = [0, 96], sizes = [2, 32], strides = [1, 1]} : vector<2x128xf32> to vector<2x32xf32>
    %43 = arith.mulf %40, %26 : vector<2x32xf32>
    %44 = arith.mulf %39, %41 : vector<2x32xf32>
    %45 = arith.addf %43, %44 : vector<2x32xf32>
    %46 = math.tanh %45 : vector<2x32xf32>
    %47 = arith.mulf %42, %46 : vector<2x32xf32>
    %48 = vector.extract_strided_slice %6 {offsets = [2, 0, 0], sizes = [1, 2, 128], strides = [1, 1, 1]} : vector<8x2x128xf32> to vector<1x2x128xf32>
    %49 = vector.shape_cast %48 : vector<1x2x128xf32> to vector<2x128xf32>
    %cst_13 = arith.constant dense<0.000000e+00> : vector<2x128xf32>
    %50 = tpu.matmul %47, %7, %cst_13 {dimension_numbers = #tpu.dot_dimension_numbers<[1], [0], [0], [1], [0, 0, 1, 1], [], []>} : vector<2x32xf32>, vector<32x128xf32>, vector<2x128xf32> -> vector<2x128xf32>
    %51 = arith.addf %49, %50 : vector<2x128xf32>
    %52 = arith.negf %51 : vector<2x128xf32>
    %53 = math.exp %52 : vector<2x128xf32>
    %cst_14 = arith.constant 1.000000e+00 : f32
    %54 = vector.broadcast %cst_14 : f32 to vector<2x128xf32>
    %55 = arith.addf %54, %53 : vector<2x128xf32>
    %56 = arith.divf %54, %55 : vector<2x128xf32>
    %57 = math.tanh %51 : vector<2x128xf32>
    %58 = vector.extract_strided_slice %56 {offsets = [0, 0], sizes = [2, 32], strides = [1, 1]} : vector<2x128xf32> to vector<2x32xf32>
    %59 = vector.extract_strided_slice %56 {offsets = [0, 32], sizes = [2, 32], strides = [1, 1]} : vector<2x128xf32> to vector<2x32xf32>
    %60 = vector.extract_strided_slice %57 {offsets = [0, 64], sizes = [2, 32], strides = [1, 1]} : vector<2x128xf32> to vector<2x32xf32>
    %61 = vector.extract_strided_slice %56 {offsets = [0, 96], sizes = [2, 32], strides = [1, 1]} : vector<2x128xf32> to vector<2x32xf32>
    %62 = arith.mulf %59, %45 : vector<2x32xf32>
    %63 = arith.mulf %58, %60 : vector<2x32xf32>
    %64 = arith.addf %62, %63 : vector<2x32xf32>
    %65 = math.tanh %64 : vector<2x32xf32>
    %66 = arith.mulf %61, %65 : vector<2x32xf32>
    %67 = vector.extract_strided_slice %6 {offsets = [3, 0, 0], sizes = [1, 2, 128], strides = [1, 1, 1]} : vector<8x2x128xf32> to vector<1x2x128xf32>
    %68 = vector.shape_cast %67 : vector<1x2x128xf32> to vector<2x128xf32>
    %cst_15 = arith.constant dense<0.000000e+00> : vector<2x128xf32>
    %69 = tpu.matmul %66, %7, %cst_15 {dimension_numbers = #tpu.dot_dimension_numbers<[1], [0], [0], [1], [0, 0, 1, 1], [], []>} : vector<2x32xf32>, vector<32x128xf32>, vector<2x128xf32> -> vector<2x128xf32>
    %70 = arith.addf %68, %69 : vector<2x128xf32>
    %71 = arith.negf %70 : vector<2x128xf32>
    %72 = math.exp %71 : vector<2x128xf32>
    %cst_16 = arith.constant 1.000000e+00 : f32
    %73 = vector.broadcast %cst_16 : f32 to vector<2x128xf32>
    %74 = arith.addf %73, %72 : vector<2x128xf32>
    %75 = arith.divf %73, %74 : vector<2x128xf32>
    %76 = math.tanh %70 : vector<2x128xf32>
    %77 = vector.extract_strided_slice %75 {offsets = [0, 0], sizes = [2, 32], strides = [1, 1]} : vector<2x128xf32> to vector<2x32xf32>
    %78 = vector.extract_strided_slice %75 {offsets = [0, 32], sizes = [2, 32], strides = [1, 1]} : vector<2x128xf32> to vector<2x32xf32>
    %79 = vector.extract_strided_slice %76 {offsets = [0, 64], sizes = [2, 32], strides = [1, 1]} : vector<2x128xf32> to vector<2x32xf32>
    %80 = vector.extract_strided_slice %75 {offsets = [0, 96], sizes = [2, 32], strides = [1, 1]} : vector<2x128xf32> to vector<2x32xf32>
    %81 = arith.mulf %78, %64 : vector<2x32xf32>
    %82 = arith.mulf %77, %79 : vector<2x32xf32>
    %83 = arith.addf %81, %82 : vector<2x32xf32>
    %84 = math.tanh %83 : vector<2x32xf32>
    %85 = arith.mulf %80, %84 : vector<2x32xf32>
    %86 = vector.extract_strided_slice %6 {offsets = [4, 0, 0], sizes = [1, 2, 128], strides = [1, 1, 1]} : vector<8x2x128xf32> to vector<1x2x128xf32>
    %87 = vector.shape_cast %86 : vector<1x2x128xf32> to vector<2x128xf32>
    %cst_17 = arith.constant dense<0.000000e+00> : vector<2x128xf32>
    %88 = tpu.matmul %85, %7, %cst_17 {dimension_numbers = #tpu.dot_dimension_numbers<[1], [0], [0], [1], [0, 0, 1, 1], [], []>} : vector<2x32xf32>, vector<32x128xf32>, vector<2x128xf32> -> vector<2x128xf32>
    %89 = arith.addf %87, %88 : vector<2x128xf32>
    %90 = arith.negf %89 : vector<2x128xf32>
    %91 = math.exp %90 : vector<2x128xf32>
    %cst_18 = arith.constant 1.000000e+00 : f32
    %92 = vector.broadcast %cst_18 : f32 to vector<2x128xf32>
    %93 = arith.addf %92, %91 : vector<2x128xf32>
    %94 = arith.divf %92, %93 : vector<2x128xf32>
    %95 = math.tanh %89 : vector<2x128xf32>
    %96 = vector.extract_strided_slice %94 {offsets = [0, 0], sizes = [2, 32], strides = [1, 1]} : vector<2x128xf32> to vector<2x32xf32>
    %97 = vector.extract_strided_slice %94 {offsets = [0, 32], sizes = [2, 32], strides = [1, 1]} : vector<2x128xf32> to vector<2x32xf32>
    %98 = vector.extract_strided_slice %95 {offsets = [0, 64], sizes = [2, 32], strides = [1, 1]} : vector<2x128xf32> to vector<2x32xf32>
    %99 = vector.extract_strided_slice %94 {offsets = [0, 96], sizes = [2, 32], strides = [1, 1]} : vector<2x128xf32> to vector<2x32xf32>
    %100 = arith.mulf %97, %83 : vector<2x32xf32>
    %101 = arith.mulf %96, %98 : vector<2x32xf32>
    %102 = arith.addf %100, %101 : vector<2x32xf32>
    %103 = math.tanh %102 : vector<2x32xf32>
    %104 = arith.mulf %99, %103 : vector<2x32xf32>
    %105 = vector.extract_strided_slice %6 {offsets = [5, 0, 0], sizes = [1, 2, 128], strides = [1, 1, 1]} : vector<8x2x128xf32> to vector<1x2x128xf32>
    %106 = vector.shape_cast %105 : vector<1x2x128xf32> to vector<2x128xf32>
    %cst_19 = arith.constant dense<0.000000e+00> : vector<2x128xf32>
    %107 = tpu.matmul %104, %7, %cst_19 {dimension_numbers = #tpu.dot_dimension_numbers<[1], [0], [0], [1], [0, 0, 1, 1], [], []>} : vector<2x32xf32>, vector<32x128xf32>, vector<2x128xf32> -> vector<2x128xf32>
    %108 = arith.addf %106, %107 : vector<2x128xf32>
    %109 = arith.negf %108 : vector<2x128xf32>
    %110 = math.exp %109 : vector<2x128xf32>
    %cst_20 = arith.constant 1.000000e+00 : f32
    %111 = vector.broadcast %cst_20 : f32 to vector<2x128xf32>
    %112 = arith.addf %111, %110 : vector<2x128xf32>
    %113 = arith.divf %111, %112 : vector<2x128xf32>
    %114 = math.tanh %108 : vector<2x128xf32>
    %115 = vector.extract_strided_slice %113 {offsets = [0, 0], sizes = [2, 32], strides = [1, 1]} : vector<2x128xf32> to vector<2x32xf32>
    %116 = vector.extract_strided_slice %113 {offsets = [0, 32], sizes = [2, 32], strides = [1, 1]} : vector<2x128xf32> to vector<2x32xf32>
    %117 = vector.extract_strided_slice %114 {offsets = [0, 64], sizes = [2, 32], strides = [1, 1]} : vector<2x128xf32> to vector<2x32xf32>
    %118 = vector.extract_strided_slice %113 {offsets = [0, 96], sizes = [2, 32], strides = [1, 1]} : vector<2x128xf32> to vector<2x32xf32>
    %119 = arith.mulf %116, %102 : vector<2x32xf32>
    %120 = arith.mulf %115, %117 : vector<2x32xf32>
    %121 = arith.addf %119, %120 : vector<2x32xf32>
    %122 = math.tanh %121 : vector<2x32xf32>
    %123 = arith.mulf %118, %122 : vector<2x32xf32>
    %124 = vector.extract_strided_slice %6 {offsets = [6, 0, 0], sizes = [1, 2, 128], strides = [1, 1, 1]} : vector<8x2x128xf32> to vector<1x2x128xf32>
    %125 = vector.shape_cast %124 : vector<1x2x128xf32> to vector<2x128xf32>
    %cst_21 = arith.constant dense<0.000000e+00> : vector<2x128xf32>
    %126 = tpu.matmul %123, %7, %cst_21 {dimension_numbers = #tpu.dot_dimension_numbers<[1], [0], [0], [1], [0, 0, 1, 1], [], []>} : vector<2x32xf32>, vector<32x128xf32>, vector<2x128xf32> -> vector<2x128xf32>
    %127 = arith.addf %125, %126 : vector<2x128xf32>
    %128 = arith.negf %127 : vector<2x128xf32>
    %129 = math.exp %128 : vector<2x128xf32>
    %cst_22 = arith.constant 1.000000e+00 : f32
    %130 = vector.broadcast %cst_22 : f32 to vector<2x128xf32>
    %131 = arith.addf %130, %129 : vector<2x128xf32>
    %132 = arith.divf %130, %131 : vector<2x128xf32>
    %133 = math.tanh %127 : vector<2x128xf32>
    %134 = vector.extract_strided_slice %132 {offsets = [0, 0], sizes = [2, 32], strides = [1, 1]} : vector<2x128xf32> to vector<2x32xf32>
    %135 = vector.extract_strided_slice %132 {offsets = [0, 32], sizes = [2, 32], strides = [1, 1]} : vector<2x128xf32> to vector<2x32xf32>
    %136 = vector.extract_strided_slice %133 {offsets = [0, 64], sizes = [2, 32], strides = [1, 1]} : vector<2x128xf32> to vector<2x32xf32>
    %137 = vector.extract_strided_slice %132 {offsets = [0, 96], sizes = [2, 32], strides = [1, 1]} : vector<2x128xf32> to vector<2x32xf32>
    %138 = arith.mulf %135, %121 : vector<2x32xf32>
    %139 = arith.mulf %134, %136 : vector<2x32xf32>
    %140 = arith.addf %138, %139 : vector<2x32xf32>
    %141 = math.tanh %140 : vector<2x32xf32>
    %142 = arith.mulf %137, %141 : vector<2x32xf32>
    %143 = vector.extract_strided_slice %6 {offsets = [7, 0, 0], sizes = [1, 2, 128], strides = [1, 1, 1]} : vector<8x2x128xf32> to vector<1x2x128xf32>
    %144 = vector.shape_cast %143 : vector<1x2x128xf32> to vector<2x128xf32>
    %cst_23 = arith.constant dense<0.000000e+00> : vector<2x128xf32>
    %145 = tpu.matmul %142, %7, %cst_23 {dimension_numbers = #tpu.dot_dimension_numbers<[1], [0], [0], [1], [0, 0, 1, 1], [], []>} : vector<2x32xf32>, vector<32x128xf32>, vector<2x128xf32> -> vector<2x128xf32>
    %146 = arith.addf %144, %145 : vector<2x128xf32>
    %147 = arith.negf %146 : vector<2x128xf32>
    %148 = math.exp %147 : vector<2x128xf32>
    %cst_24 = arith.constant 1.000000e+00 : f32
    %149 = vector.broadcast %cst_24 : f32 to vector<2x128xf32>
    %150 = arith.addf %149, %148 : vector<2x128xf32>
    %151 = arith.divf %149, %150 : vector<2x128xf32>
    %152 = math.tanh %146 : vector<2x128xf32>
    %153 = vector.extract_strided_slice %151 {offsets = [0, 0], sizes = [2, 32], strides = [1, 1]} : vector<2x128xf32> to vector<2x32xf32>
    %154 = vector.extract_strided_slice %151 {offsets = [0, 32], sizes = [2, 32], strides = [1, 1]} : vector<2x128xf32> to vector<2x32xf32>
    %155 = vector.extract_strided_slice %152 {offsets = [0, 64], sizes = [2, 32], strides = [1, 1]} : vector<2x128xf32> to vector<2x32xf32>
    %156 = vector.extract_strided_slice %151 {offsets = [0, 96], sizes = [2, 32], strides = [1, 1]} : vector<2x128xf32> to vector<2x32xf32>
    %157 = arith.mulf %154, %140 : vector<2x32xf32>
    %158 = arith.mulf %153, %155 : vector<2x32xf32>
    %159 = arith.addf %157, %158 : vector<2x32xf32>
    %160 = math.tanh %159 : vector<2x32xf32>
    %161 = arith.mulf %156, %160 : vector<2x32xf32>
    %c0_25 = arith.constant 0 : index
    %c0_26 = arith.constant 0 : index
    %162 = vector.load %arg5[%c0_25, %c0_26] : memref<2x1xf32, #tpu.memory_space<vmem>>, vector<2x1xf32>
    %163 = vector.broadcast %162 : vector<2x1xf32> to vector<2x32xf32>
    %164 = arith.mulf %161, %163 : vector<2x32xf32>
    %c0_27 = arith.constant 0 : index
    %c0_28 = arith.constant 0 : index
    %165 = vector.load %arg7[%c0_27, %c0_28] : memref<32x128xf32, #tpu.memory_space<vmem>>, vector<32x128xf32>
    %cst_29 = arith.constant dense<0.000000e+00> : vector<2x128xf32>
    %166 = tpu.matmul %164, %165, %cst_29 {dimension_numbers = #tpu.dot_dimension_numbers<[1], [0], [0], [1], [0, 0, 1, 1], [], []>} : vector<2x32xf32>, vector<32x128xf32>, vector<2x128xf32> -> vector<2x128xf32>
    %c0_30 = arith.constant 0 : index
    %c0_31 = arith.constant 0 : index
    %167 = vector.load %arg6[%c0_30, %c0_31] : memref<2x32xf32, #tpu.memory_space<vmem>>, vector<2x32xf32>
    %c0_32 = arith.constant 0 : index
    %c0_33 = arith.constant 0 : index
    %168 = vector.load %arg8[%c0_32, %c0_33] : memref<32x128xf32, #tpu.memory_space<vmem>>, vector<32x128xf32>
    %cst_34 = arith.constant dense<0.000000e+00> : vector<2x128xf32>
    %169 = tpu.matmul %167, %168, %cst_34 {dimension_numbers = #tpu.dot_dimension_numbers<[1], [0], [0], [1], [0, 0, 1, 1], [], []>} : vector<2x32xf32>, vector<32x128xf32>, vector<2x128xf32> -> vector<2x128xf32>
    %170 = arith.addf %166, %169 : vector<2x128xf32>
    %c0_35 = arith.constant 0 : index
    %c0_36 = arith.constant 0 : index
    %171 = vector.load %arg9[%c0_35, %c0_36] : memref<1x128xf32, #tpu.memory_space<vmem>>, vector<1x128xf32>
    %172 = vector.broadcast %171 : vector<1x128xf32> to vector<2x128xf32>
    %173 = arith.addf %170, %172 : vector<2x128xf32>
    %cst_37 = arith.constant 0.000000e+00 : f32
    %174 = vector.broadcast %cst_37 : f32 to vector<2x128xf32>
    %175 = arith.maximumf %173, %174 : vector<2x128xf32>
    %c0_38 = arith.constant 0 : index
    %c0_39 = arith.constant 0 : index
    %176 = vector.load %arg10[%c0_38, %c0_39] : memref<128x1xf32, #tpu.memory_space<vmem>>, vector<128x1xf32>
    %cst_40 = arith.constant dense<0.000000e+00> : vector<2x1xf32>
    %177 = tpu.matmul %175, %176, %cst_40 {dimension_numbers = #tpu.dot_dimension_numbers<[1], [0], [0], [1], [0, 0, 1, 1], [], []>} : vector<2x128xf32>, vector<128x1xf32>, vector<2x1xf32> -> vector<2x1xf32>
    %c0_41 = arith.constant 0 : index
    %c0_42 = arith.constant 0 : index
    %178 = vector.load %arg11[%c0_41, %c0_42] : memref<1x1xf32, #tpu.memory_space<vmem>>, vector<1x1xf32>
    %179 = vector.broadcast %178 : vector<1x1xf32> to vector<2x1xf32>
    %180 = arith.addf %177, %179 : vector<2x1xf32>
    %181 = arith.negf %180 : vector<2x1xf32>
    %182 = math.exp %181 : vector<2x1xf32>
    %cst_43 = arith.constant 1.000000e+00 : f32
    %183 = vector.broadcast %cst_43 : f32 to vector<2x1xf32>
    %184 = arith.addf %183, %182 : vector<2x1xf32>
    %185 = arith.divf %183, %184 : vector<2x1xf32>
    %c0_44 = arith.constant 0 : index
    %c0_45 = arith.constant 0 : index
    %186 = vector.load %arg12[%c0_44, %c0_45] : memref<2x1xf32, #tpu.memory_space<vmem>>, vector<2x1xf32>
    tpu.vector_store %arg12[%c0_44, %c0_45], %185 {strides = array<i32>} : memref<2x1xf32, #tpu.memory_space<vmem>>, vector<2x1xf32>,
    return
  }
  func.func @transform_0(%arg0: i32) -> (i32, i32) {
    %c0_i32 = arith.constant 0 : i32
    %c0_i32_0 = arith.constant 0 : i32
    %c0_i32_1 = arith.constant 0 : i32
    return %c0_i32, %c0_i32_0 : i32, i32
  }
  func.func @transform_1(%arg0: i32) -> (i32, i32) {
    %c0_i32 = arith.constant 0 : i32
    %c0_i32_0 = arith.constant 0 : i32
    %c0_i32_1 = arith.constant 0 : i32
    return %c0_i32, %c0_i32_0 : i32, i32
  }
  func.func @transform_2(%arg0: i32) -> (i32, i32) {
    %c0_i32 = arith.constant 0 : i32
    %c0_i32_0 = arith.constant 0 : i32
    %c0_i32_1 = arith.constant 0 : i32
    return %c0_i32, %c0_i32_0 : i32, i32
  }
  func.func @transform_3(%arg0: i32) -> (i32, i32) {
    %c0_i32 = arith.constant 0 : i32
    %c0_i32_0 = arith.constant 0 : i32
    %c0_i32_1 = arith.constant 0 : i32
    return %c0_i32, %c0_i32_0 : i32, i32
  }
  func.func @transform_4(%arg0: i32) -> (i32, i32) {
    %c0_i32 = arith.constant 0 : i32
    %c0_i32_0 = arith.constant 0 : i32
    %c0_i32_1 = arith.constant 0 : i32
    return %c0_i32, %c0_i32_0 : i32, i32
  }
  func.func @transform_5(%arg0: i32) -> (i32, i32) {
    %c0_i32 = arith.constant 0 : i32
    %c0_i32_0 = arith.constant 0 : i32
    %c0_i32_1 = arith.constant 0 : i32
    return %c0_i32, %c0_i32_0 : i32, i32
  }
  func.func @transform_6(%arg0: i32) -> (i32, i32) {
    %c0_i32 = arith.constant 0 : i32
    %c0_i32_0 = arith.constant 0 : i32
    %c0_i32_1 = arith.constant 0 : i32
    return %c0_i32, %c0_i32_0 : i32, i32
  }
  func.func @transform_7(%arg0: i32) -> (i32, i32) {
    %c0_i32 = arith.constant 0 : i32
    %c0_i32_0 = arith.constant 0 : i32
    %c0_i32_1 = arith.constant 0 : i32
    return %c0_i32, %c0_i32_0 : i32, i32
  }
  func.func @transform_8(%arg0: i32) -> (i32, i32) {
    %c0_i32 = arith.constant 0 : i32
    %c0_i32_0 = arith.constant 0 : i32
    %c0_i32_1 = arith.constant 0 : i32
    return %c0_i32, %c0_i32_0 : i32, i32
  }
  func.func @transform_9(%arg0: i32) -> (i32, i32) {
    %c0_i32 = arith.constant 0 : i32
    %c0_i32_0 = arith.constant 0 : i32
    %c0_i32_1 = arith.constant 0 : i32
    return %c0_i32, %c0_i32_0 : i32, i32
  }
  func.func @transform_10(%arg0: i32) -> (i32, i32) {
    %c0_i32 = arith.constant 0 : i32
    %c0_i32_0 = arith.constant 0 : i32
    %c0_i32_1 = arith.constant 0 : i32
    return %c0_i32, %c0_i32_0 : i32, i32
  }
  func.func @transform_11(%arg0: i32) -> (i32, i32) {
    %c0_i32 = arith.constant 0 : i32
    %c0_i32_0 = arith.constant 0 : i32
    %c0_i32_1 = arith.constant 0 : i32
    return %c0_i32, %c0_i32_0 : i32, i32
  }
}

</mosaic_0001>

<llo_original>
// kernel: tpu_custom_call.1
$region0: #{tpu_custom_call.1}
  #allocation0 [shape = 'u32[]', space=smem, size = 0x4, offset = 0x4, fixed_abs, tag = 'smem constant byte address 0x4 - core index']
  #allocation1 [shape = 'u32[144,128]{1,0:T(1,128)}', space=vmem, size = 0x12000, scoped, tag = 'internal scratch']
  #allocation2 [shape = 'f32[1,1]{1,0:T(1,128)S(1)}', space=vmem, size = 0x200, scoped, tag = 'scoped memory for tpu_custom_call.1']
  %s0 = inlined_call_operand.hbm [shape: f32[16,32], index: 0, kind: input, shape index: {}]
  %s1 = inlined_call_operand.vmem [shape: f32[32,128], index: 1, kind: input, shape index: {}]
  %s2 = inlined_call_operand.vmem [shape: f32[32,128], index: 2, kind: input, shape index: {}]
  %s3 = inlined_call_operand.vmem [shape: f32[1,128], index: 3, kind: input, shape index: {}]
  %s4 = inlined_call_operand.vmem [shape: f32[2,1], index: 4, kind: input, shape index: {}]
  %s5 = inlined_call_operand.vmem [shape: f32[2,32], index: 5, kind: input, shape index: {}]
  %s6 = inlined_call_operand.vmem [shape: f32[32,128], index: 6, kind: input, shape index: {}]
  %s7 = inlined_call_operand.vmem [shape: f32[32,128], index: 7, kind: input, shape index: {}]
  %s8 = inlined_call_operand.vmem [shape: f32[1,128], index: 8, kind: input, shape index: {}]
  %s9 = inlined_call_operand.vmem [shape: f32[128,1], index: 9, kind: input, shape index: {}]
  %s10 = inlined_call_operand.<no memory space> [shape: f32[1,1], index: 10, kind: input, shape index: {}]
  %s11 = inlined_call_operand.vmem [shape: f32[2,1], index: 11, kind: output, shape index: {}]
  %s12 = sld [smem:[#allocation0]]
  $region58: #{tpu_custom_call.1} parent=0
    _
  %s14 = ssub.s32 1, %s12
  %s15 = scalar_select 0, %s14, %s12
  %v16 = vstv %s10
  %17 = vst [vmem:[#allocation2] sm:$0x1] %v16
  $region1: #{tpu_custom_call.1} parent=0
    #allocation3 [shape = 'u8[8192]{0}', space=vmem, size = 0x2000, scoped, tag = 'input window, operand 0, single buffered']
    #allocation4 [shape = 's32[1]{0}', space=sflag, size = 0x4, scoped, tag = 'scoped memory for tpu_custom_call.1']
    %18 = vsyncpa [#allocation4], 0
    // Predicated region
    $region2: #{tpu_custom_call.1} parent=1 // pred_check
      _
    $region3: #{tpu_custom_call.1} parent=1 // pred_check_branch
      %20 = sbr.rel (0) target = $region5
    $region4: #{tpu_custom_call.1} parent=1 // pred_region
      %s22 = ssub.s32 256, 256
      %23 = vsyncadd [#allocation4], %s22
      %s24 = sshll.u32 [#allocation3], 4
      %s25 = int_to_ptr.vmem [resolvable:$true] %s24
      %30 = dma.hbm_to_vmem [thread:$0]  %s0, 256, %s25, [#allocation4], 128, 128, 8
    $region5: #{tpu_custom_call.1} parent=1 // pred_fallthru
      _
    // Predicated region
    $region6: #{tpu_custom_call.1} parent=1 // pred_check
      _
    $region7: #{tpu_custom_call.1} parent=1 // pred_check_branch
      %32 = sbr.rel (0) target = $region9
    $region8: #{tpu_custom_call.1} parent=1 // pred_region
      _
    $region9: #{tpu_custom_call.1} parent=1 // pred_fallthru
      _
    // Predicated region
    $region10: #{tpu_custom_call.1} parent=1 // pred_check
      _
    $region11: #{tpu_custom_call.1} parent=1 // pred_check_branch
      %34 = sbr.rel (0) target = $region13
    $region12: #{tpu_custom_call.1} parent=1 // pred_region
      _
    $region13: #{tpu_custom_call.1} parent=1 // pred_fallthru
      _
    // Predicated region
    $region14: #{tpu_custom_call.1} parent=1 // pred_check
      _
    $region15: #{tpu_custom_call.1} parent=1 // pred_check_branch
      %36 = sbr.rel (0) target = $region17
    $region16: #{tpu_custom_call.1} parent=1 // pred_region
      _
    $region17: #{tpu_custom_call.1} parent=1 // pred_fallthru
      _
    // Predicated region
    $region18: #{tpu_custom_call.1} parent=1 // pred_check
      _
    $region19: #{tpu_custom_call.1} parent=1 // pred_check_branch
      %38 = sbr.rel (0) target = $region21
    $region20: #{tpu_custom_call.1} parent=1 // pred_region
      _
    $region21: #{tpu_custom_call.1} parent=1 // pred_fallthru
      _
    // Predicated region
    $region22: #{tpu_custom_call.1} parent=1 // pred_check
      _
    $region23: #{tpu_custom_call.1} parent=1 // pred_check_branch
      %40 = sbr.rel (0) target = $region25
    $region24: #{tpu_custom_call.1} parent=1 // pred_region
      _
    $region25: #{tpu_custom_call.1} parent=1 // pred_fallthru
      _
    // Predicated region
    $region26: #{tpu_custom_call.1} parent=1 // pred_check
      _
    $region27: #{tpu_custom_call.1} parent=1 // pred_check_branch
      %42 = sbr.rel (0) target = $region29
    $region28: #{tpu_custom_call.1} parent=1 // pred_region
      _
    $region29: #{tpu_custom_call.1} parent=1 // pred_fallthru
      _
    // Predicated region
    $region30: #{tpu_custom_call.1} parent=1 // pred_check
      _
    $region31: #{tpu_custom_call.1} parent=1 // pred_check_branch
      %44 = sbr.rel (0) target = $region33
    $region32: #{tpu_custom_call.1} parent=1 // pred_region
      _
    $region33: #{tpu_custom_call.1} parent=1 // pred_fallthru
      _
    // Predicated region
    $region34: #{tpu_custom_call.1} parent=1 // pred_check
      _
    $region35: #{tpu_custom_call.1} parent=1 // pred_check_branch
      %46 = sbr.rel (0) target = $region37
    $region36: #{tpu_custom_call.1} parent=1 // pred_region
      _
    $region37: #{tpu_custom_call.1} parent=1 // pred_fallthru
      _
    // Predicated region
    $region38: #{tpu_custom_call.1} parent=1 // pred_check
      _
    $region39: #{tpu_custom_call.1} parent=1 // pred_check_branch
      %48 = sbr.rel (0) target = $region41
    $region40: #{tpu_custom_call.1} parent=1 // pred_region
      _
    $region41: #{tpu_custom_call.1} parent=1 // pred_fallthru
      _
    // Predicated region
    $region42: #{tpu_custom_call.1} parent=1 // pred_check
      _
    $region43: #{tpu_custom_call.1} parent=1 // pred_check_branch
      %50 = sbr.rel (0) target = $region45
    $region44: #{tpu_custom_call.1} parent=1 // pred_region
      _
    $region45: #{tpu_custom_call.1} parent=1 // pred_fallthru
      _
    // Predicated region
    $region46: #{tpu_custom_call.1} parent=1 // pred_check
      _
    $region47: #{tpu_custom_call.1} parent=1 // pred_check_branch
      %52 = sbr.rel (0) target = $region49
    $region48: #{tpu_custom_call.1} parent=1 // pred_region
      %53 = dma.done [#allocation4], 256
    $region49: #{tpu_custom_call.1} parent=1 // pred_fallthru
      _
    %v54 = vld [vmem:[#allocation3] sm:$0xff]
    %v55 = vld [vmem:[#allocation3 + $0x8] sm:$0xff]
    %v56 = vld [vmem:[%s1] sm:$0xff]
    %v57 = vld [vmem:[%s1 + $0x8] sm:$0xff]
    %v58 = vld [vmem:[%s1 + $0x10] sm:$0xff]
    %v59 = vld [vmem:[%s1 + $0x18] sm:$0xff]
    %v60 = vld [vmem:[%s3] sm:$0x1]
    %v62 = vlaneseq
    %v63 = vshrl.u32 %v62, 7
    %v64 = vsub.s32 0, %v63
    %v65 = vrot.slane %v60, %v64
    %vm67 = vcmask 261120
    %v69 = vsel %vm67, %v54, 0
    %v72 = vsel %vm67, %v55, 0
    %74 = vmatprep.subr.mxu0 0.0
    %75 = vmatpush1.msra.mxu0 0.0
    %76 = vmatprep.subr.mxu0 0.0
    %77 = vmatpush1.msra.mxu0 0.0
    %78 = vmatprep.subr.mxu0 0.0
    %79 = vmatpush1.msra.mxu0 0.0
    %80 = vmatprep.subr.mxu0 0.0
    %81 = vmatpush1.msra.mxu0 0.0
    %82 = vmatprep.subr.mxu0 0.0
    %83 = vmatpush1.msra.mxu0 0.0
    %84 = vmatprep.subr.mxu0 0.0
    %85 = vmatpush1.msra.mxu0 0.0
    %86 = vmatprep.subr.mxu0 0.0
    %87 = vmatpush1.msra.mxu0 0.0
    %88 = vmatprep.subr.mxu0 0.0
    %89 = vmatpush1.msra.mxu0 0.0
    %90 = vmatprep.subr.mxu0 0.0
    %91 = vmatpush1.msra.mxu0 0.0
    %92 = vmatprep.subr.mxu0 0.0
    %93 = vmatpush1.msra.mxu0 0.0
    %94 = vmatprep.subr.mxu0 0.0
    %95 = vmatpush1.msra.mxu0 0.0
    %96 = vmatprep.subr.mxu0 0.0
    %97 = vmatpush1.msra.mxu0 0.0
    %98 = vmatprep.subr.mxu0 0.0
    %99 = vmatpush1.msra.mxu0 %v59
    %100 = vmatprep.subr.mxu0 0.0
    %101 = vmatpush1.msra.mxu0 %v58
    %102 = vmatprep.subr.mxu0 0.0
    %103 = vmatpush1.msra.mxu0 %v57
    %104 = vmatprep.subr.mxu0 0.0
    %105 = vmatpush1.msra.mxu0 %v56
    %106 = vmatprep.subr.mxu0 0.0
    %107 = vmatpush2.msra.mxu0 0.0
    %108 = vmatprep.subr.mxu0 0.0
    %109 = vmatpush2.msra.mxu0 0.0
    %110 = vmatprep.subr.mxu0 0.0
    %111 = vmatpush2.msra.mxu0 0.0
    %112 = vmatprep.subr.mxu0 0.0
    %113 = vmatpush2.msra.mxu0 0.0
    %114 = vmatprep.subr.mxu0 0.0
    %115 = vmatpush2.msra.mxu0 0.0
    %116 = vmatprep.subr.mxu0 0.0
    %117 = vmatpush2.msra.mxu0 0.0
    %118 = vmatprep.subr.mxu0 0.0
    %119 = vmatpush2.msra.mxu0 0.0
    %120 = vmatprep.subr.mxu0 0.0
    %121 = vmatpush2.msra.mxu0 0.0
    %122 = vmatprep.subr.mxu0 0.0
    %123 = vmatpush2.msra.mxu0 0.0
    %124 = vmatprep.subr.mxu0 0.0
    %125 = vmatpush2.msra.mxu0 0.0
    %126 = vmatprep.subr.mxu0 0.0
    %127 = vmatpush2.msra.mxu0 0.0
    %128 = vmatprep.subr.mxu0 0.0
    %129 = vmatpush2.msra.mxu0 0.0
    %130 = vmatprep.subr.mxu0 0.0
    %131 = vmatpush2.msra.mxu0 0.0
    %132 = vmatprep.subr.mxu0 0.0
    %133 = vmatpush2.msra.mxu0 0.0
    %134 = vmatprep.subr.mxu0 0.0
    %135 = vmatpush2.msra.mxu0 0.0
    %136 = vmatprep.subr.mxu0 0.0
    %137 = vmatpush2.msra.mxu0 0.0
    %138 = vmatprep.mubr.f32.mxu0 0.0
    %139 = vmatmul.mubr.f32.gmra.mxu0 %v69
    %v140 = vpop.f32.mrf.mxu0
    %v141 = vadd.f32 %v65, %v140
    %v142 = vpop.f32.mrf.mxu0
    %143 = vmatprep.mubr.f32.mxu0 0.0
    %144 = vmatmul.mubr.f32.gmra.mxu0 %v72
    %v145 = vpop.f32.mrf.mxu0
    %v146 = vadd.f32 %v65, %v145
    %v147 = vpop.f32.mrf.mxu0
    %148 = vdwg.mxu0
    %v151 = vcombine.high %v141, %v141
    %v153 = vunpack.c.l.s4 1983009808
    %v154 = vunpack.c.0.s8 %v153
    %v155 = vlaneseq
    %v156 = vshrl.u32 %v155, 7
    %v157 = vsub.s32 %v154, %v156
    %v158 = vrot.slane %v141, %v157
    %v160 = vunpack.c.l.s4 1983009808
    %v161 = vunpack.c.0.s8 %v160
    %v162 = vlaneseq
    %v163 = vshrl.u32 %v162, 7
    %v164 = vsub.s32 %v161, %v163
    %v165 = vrot.slane %v151, %v164
    %v166 = vcombine.high %v158, %v158
    %v167 = vcombine.high %v165, %v165
    %v168 = vcombine.high %v146, %v146
    %v170 = vunpack.c.l.s4 1983009808
    %v171 = vunpack.c.0.s8 %v170
    %v172 = vlaneseq
    %v173 = vshrl.u32 %v172, 7
    %v174 = vsub.s32 %v171, %v173
    %v175 = vrot.slane %v146, %v174
    %v177 = vunpack.c.l.s4 1983009808
    %v178 = vunpack.c.0.s8 %v177
    %v179 = vlaneseq
    %v180 = vshrl.u32 %v179, 7
    %v181 = vsub.s32 %v178, %v180
    %v182 = vrot.slane %v168, %v181
    %v183 = vcombine.high %v175, %v175
    %v184 = vcombine.high %v182, %v182
    %v193 = vld [vmem:[%s2] sm:$0xff]
    %v194 = vld [vmem:[%s2 + $0x8] sm:$0xff]
    %v195 = vld [vmem:[%s2 + $0x10] sm:$0xff]
    %v196 = vld [vmem:[%s2 + $0x18] sm:$0xff]
    %v198 = vsel %vm67, 0.0, 0
    %200 = vmatprep.subr.mxu0 0.0
    %201 = vmatpush1.msra.mxu0 0.0
    %202 = vmatprep.subr.mxu0 0.0
    %203 = vmatpush1.msra.mxu0 0.0
    %204 = vmatprep.subr.mxu0 0.0
    %205 = vmatpush1.msra.mxu0 0.0
    %206 = vmatprep.subr.mxu0 0.0
    %207 = vmatpush1.msra.mxu0 0.0
    %208 = vmatprep.subr.mxu0 0.0
    %209 = vmatpush1.msra.mxu0 0.0
    %210 = vmatprep.subr.mxu0 0.0
    %211 = vmatpush1.msra.mxu0 0.0
    %212 = vmatprep.subr.mxu0 0.0
    %213 = vmatpush1.msra.mxu0 0.0
    %214 = vmatprep.subr.mxu0 0.0
    %215 = vmatpush1.msra.mxu0 0.0
    %216 = vmatprep.subr.mxu0 0.0
    %217 = vmatpush1.msra.mxu0 0.0
    %218 = vmatprep.subr.mxu0 0.0
    %219 = vmatpush1.msra.mxu0 0.0
    %220 = vmatprep.subr.mxu0 0.0
    %221 = vmatpush1.msra.mxu0 0.0
    %222 = vmatprep.subr.mxu0 0.0
    %223 = vmatpush1.msra.mxu0 0.0
    %224 = vmatprep.subr.mxu0 0.0
    %225 = vmatpush1.msra.mxu0 %v196
    %226 = vmatprep.subr.mxu0 0.0
    %227 = vmatpush1.msra.mxu0 %v195
    %228 = vmatprep.subr.mxu0 0.0
    %229 = vmatpush1.msra.mxu0 %v194
    %230 = vmatprep.subr.mxu0 0.0
    %231 = vmatpush1.msra.mxu0 %v193
    %232 = vmatprep.subr.mxu0 0.0
    %233 = vmatpush2.msra.mxu0 0.0
    %234 = vmatprep.subr.mxu0 0.0
    %235 = vmatpush2.msra.mxu0 0.0
    %236 = vmatprep.subr.mxu0 0.0
    %237 = vmatpush2.msra.mxu0 0.0
    %238 = vmatprep.subr.mxu0 0.0
    %239 = vmatpush2.msra.mxu0 0.0
    %240 = vmatprep.subr.mxu0 0.0
    %241 = vmatpush2.msra.mxu0 0.0
    %242 = vmatprep.subr.mxu0 0.0
    %243 = vmatpush2.msra.mxu0 0.0
    %244 = vmatprep.subr.mxu0 0.0
    %245 = vmatpush2.msra.mxu0 0.0
    %246 = vmatprep.subr.mxu0 0.0
    %247 = vmatpush2.msra.mxu0 0.0
    %248 = vmatprep.subr.mxu0 0.0
    %249 = vmatpush2.msra.mxu0 0.0
    %250 = vmatprep.subr.mxu0 0.0
    %251 = vmatpush2.msra.mxu0 0.0
    %252 = vmatprep.subr.mxu0 0.0
    %253 = vmatpush2.msra.mxu0 0.0
    %254 = vmatprep.subr.mxu0 0.0
    %255 = vmatpush2.msra.mxu0 0.0
    %256 = vmatprep.subr.mxu0 0.0
    %257 = vmatpush2.msra.mxu0 0.0
    %258 = vmatprep.subr.mxu0 0.0
    %259 = vmatpush2.msra.mxu0 0.0
    %260 = vmatprep.subr.mxu0 0.0
    %261 = vmatpush2.msra.mxu0 0.0
    %262 = vmatprep.subr.mxu0 0.0
    %263 = vmatpush2.msra.mxu0 0.0
    %264 = vmatprep.mubr.f32.mxu0 0.0
    %265 = vmatmul.mubr.f32.gmra.mxu0 %v198
    %v266 = vpop.f32.mrf.mxu0
    %v267 = vadd.f32 0.0, %v266
    %v268 = vpop.f32.mrf.mxu0
    %269 = vdwg.mxu0
    %v270 = vadd.f32 %v158, %v267
    %v271 = vxor.u32 %v270, 2147483648
    %v272 = vmul.f32 %v271, 1.442695
    %v273 = vpow.pop %v272
    %v274 = vadd.f32 %v273, 1.0
    %v275 = vrcp.pop %v274
    %v276 = vmul.f32 1.0, %v275
    %v277 = vtanh.pop %v270
    %v278 = vmul.f32 %v276, 0.0
    %280 = vrot.lane.b32.xlu0 %v277, 64
    %v281 = vpop.permute.xlu0 %280
    %v283 = vmul.f32 %v276, %v281
    %285 = vrot.lane.b32.xlu0 %v283, 32
    %v286 = vpop.permute.xlu0 %285
    %v288 = vadd.f32 %v278, %v286
    %v289 = vtanh.pop %v288
    %291 = vrot.lane.b32.xlu0 %v289, 64
    %v292 = vpop.permute.xlu0 %291
    %v294 = vmul.f32 %v276, %v292
    %v297 = vunpack.c.l.s4 1983009808
    %v298 = vunpack.c.0.s8 %v297
    %v299 = vlaneseq
    %v300 = vshrl.u32 %v299, 7
    %v301 = vsub.s32 %v298, %v300
    %v302 = vrot.slane %v294, %v301
    %303 = vrot.lane.b32.xlu0 %v302, 32
    %v304 = vpop.permute.xlu0 %303
    %v305 = vsel %vm67, %v304, 0
    %307 = vmatprep.subr.mxu0 0.0
    %308 = vmatpush1.msra.mxu0 0.0
    %309 = vmatprep.subr.mxu0 0.0
    %310 = vmatpush1.msra.mxu0 0.0
    %311 = vmatprep.subr.mxu0 0.0
    %312 = vmatpush1.msra.mxu0 0.0
    %313 = vmatprep.subr.mxu0 0.0
    %314 = vmatpush1.msra.mxu0 0.0
    %315 = vmatprep.subr.mxu0 0.0
    %316 = vmatpush1.msra.mxu0 0.0
    %317 = vmatprep.subr.mxu0 0.0
    %318 = vmatpush1.msra.mxu0 0.0
    %319 = vmatprep.subr.mxu0 0.0
    %320 = vmatpush1.msra.mxu0 0.0
    %321 = vmatprep.subr.mxu0 0.0
    %322 = vmatpush1.msra.mxu0 0.0
    %323 = vmatprep.subr.mxu0 0.0
    %324 = vmatpush1.msra.mxu0 0.0
    %325 = vmatprep.subr.mxu0 0.0
    %326 = vmatpush1.msra.mxu0 0.0
    %327 = vmatprep.subr.mxu0 0.0
    %328 = vmatpush1.msra.mxu0 0.0
    %329 = vmatprep.subr.mxu0 0.0
    %330 = vmatpush1.msra.mxu0 0.0
    %331 = vmatprep.subr.mxu0 0.0
    %332 = vmatpush1.msra.mxu0 %v196
    %333 = vmatprep.subr.mxu0 0.0
    %334 = vmatpush1.msra.mxu0 %v195
    %335 = vmatprep.subr.mxu0 0.0
    %336 = vmatpush1.msra.mxu0 %v194
    %337 = vmatprep.subr.mxu0 0.0
    %338 = vmatpush1.msra.mxu0 %v193
    %339 = vmatprep.subr.mxu0 0.0
    %340 = vmatpush2.msra.mxu0 0.0
    %341 = vmatprep.subr.mxu0 0.0
    %342 = vmatpush2.msra.mxu0 0.0
    %343 = vmatprep.subr.mxu0 0.0
    %344 = vmatpush2.msra.mxu0 0.0
    %345 = vmatprep.subr.mxu0 0.0
    %346 = vmatpush2.msra.mxu0 0.0
    %347 = vmatprep.subr.mxu0 0.0
    %348 = vmatpush2.msra.mxu0 0.0
    %349 = vmatprep.subr.mxu0 0.0
    %350 = vmatpush2.msra.mxu0 0.0
    %351 = vmatprep.subr.mxu0 0.0
    %352 = vmatpush2.msra.mxu0 0.0
    %353 = vmatprep.subr.mxu0 0.0
    %354 = vmatpush2.msra.mxu0 0.0
    %355 = vmatprep.subr.mxu0 0.0
    %356 = vmatpush2.msra.mxu0 0.0
    %357 = vmatprep.subr.mxu0 0.0
    %358 = vmatpush2.msra.mxu0 0.0
    %359 = vmatprep.subr.mxu0 0.0
    %360 = vmatpush2.msra.mxu0 0.0
    %361 = vmatprep.subr.mxu0 0.0
    %362 = vmatpush2.msra.mxu0 0.0
    %363 = vmatprep.subr.mxu0 0.0
    %364 = vmatpush2.msra.mxu0 0.0
    %365 = vmatprep.subr.mxu0 0.0
    %366 = vmatpush2.msra.mxu0 0.0
    %367 = vmatprep.subr.mxu0 0.0
    %368 = vmatpush2.msra.mxu0 0.0
    %369 = vmatprep.subr.mxu0 0.0
    %370 = vmatpush2.msra.mxu0 0.0
    %371 = vmatprep.mubr.f32.mxu0 0.0
    %372 = vmatmul.mubr.f32.gmra.mxu0 %v305
    %v373 = vpop.f32.mrf.mxu0
    %v374 = vadd.f32 0.0, %v373
    %v375 = vpop.f32.mrf.mxu0
    %376 = vdwg.mxu0
    %v377 = vadd.f32 %v166, %v374
    %v378 = vxor.u32 %v377, 2147483648
    %v379 = vmul.f32 %v378, 1.442695
    %v380 = vpow.pop %v379
    %v381 = vadd.f32 %v380, 1.0
    %v382 = vrcp.pop %v381
    %v383 = vmul.f32 1.0, %v382
    %v384 = vtanh.pop %v377
    %v385 = vmul.f32 %v383, %v288
    %387 = vrot.lane.b32.xlu0 %v384, 64
    %v388 = vpop.permute.xlu0 %387
    %v390 = vmul.f32 %v383, %v388
    %392 = vrot.lane.b32.xlu0 %v390, 32
    %v393 = vpop.permute.xlu0 %392
    %v395 = vadd.f32 %v385, %v393
    %v396 = vtanh.pop %v395
    %398 = vrot.lane.b32.xlu0 %v396, 64
    %v399 = vpop.permute.xlu0 %398
    %v401 = vmul.f32 %v383, %v399
    %v404 = vunpack.c.l.s4 1983009808
    %v405 = vunpack.c.0.s8 %v404
    %v406 = vlaneseq
    %v407 = vshrl.u32 %v406, 7
    %v408 = vsub.s32 %v405, %v407
    %v409 = vrot.slane %v401, %v408
    %410 = vrot.lane.b32.xlu0 %v409, 32
    %v411 = vpop.permute.xlu0 %410
    %v412 = vsel %vm67, %v411, 0
    %414 = vmatprep.subr.mxu0 0.0
    %415 = vmatpush1.msra.mxu0 0.0
    %416 = vmatprep.subr.mxu0 0.0
    %417 = vmatpush1.msra.mxu0 0.0
    %418 = vmatprep.subr.mxu0 0.0
    %419 = vmatpush1.msra.mxu0 0.0
    %420 = vmatprep.subr.mxu0 0.0
    %421 = vmatpush1.msra.mxu0 0.0
    %422 = vmatprep.subr.mxu0 0.0
    %423 = vmatpush1.msra.mxu0 0.0
    %424 = vmatprep.subr.mxu0 0.0
    %425 = vmatpush1.msra.mxu0 0.0
    %426 = vmatprep.subr.mxu0 0.0
    %427 = vmatpush1.msra.mxu0 0.0
    %428 = vmatprep.subr.mxu0 0.0
    %429 = vmatpush1.msra.mxu0 0.0
    %430 = vmatprep.subr.mxu0 0.0
    %431 = vmatpush1.msra.mxu0 0.0
    %432 = vmatprep.subr.mxu0 0.0
    %433 = vmatpush1.msra.mxu0 0.0
    %434 = vmatprep.subr.mxu0 0.0
    %435 = vmatpush1.msra.mxu0 0.0
    %436 = vmatprep.subr.mxu0 0.0
    %437 = vmatpush1.msra.mxu0 0.0
    %438 = vmatprep.subr.mxu0 0.0
    %439 = vmatpush1.msra.mxu0 %v196
    %440 = vmatprep.subr.mxu0 0.0
    %441 = vmatpush1.msra.mxu0 %v195
    %442 = vmatprep.subr.mxu0 0.0
    %443 = vmatpush1.msra.mxu0 %v194
    %444 = vmatprep.subr.mxu0 0.0
    %445 = vmatpush1.msra.mxu0 %v193
    %446 = vmatprep.subr.mxu0 0.0
    %447 = vmatpush2.msra.mxu0 0.0
    %448 = vmatprep.subr.mxu0 0.0
    %449 = vmatpush2.msra.mxu0 0.0
    %450 = vmatprep.subr.mxu0 0.0
    %451 = vmatpush2.msra.mxu0 0.0
    %452 = vmatprep.subr.mxu0 0.0
    %453 = vmatpush2.msra.mxu0 0.0
    %454 = vmatprep.subr.mxu0 0.0
    %455 = vmatpush2.msra.mxu0 0.0
    %456 = vmatprep.subr.mxu0 0.0
    %457 = vmatpush2.msra.mxu0 0.0
    %458 = vmatprep.subr.mxu0 0.0
    %459 = vmatpush2.msra.mxu0 0.0
    %460 = vmatprep.subr.mxu0 0.0
    %461 = vmatpush2.msra.mxu0 0.0
    %462 = vmatprep.subr.mxu0 0.0
    %463 = vmatpush2.msra.mxu0 0.0
    %464 = vmatprep.subr.mxu0 0.0
    %465 = vmatpush2.msra.mxu0 0.0
    %466 = vmatprep.subr.mxu0 0.0
    %467 = vmatpush2.msra.mxu0 0.0
    %468 = vmatprep.subr.mxu0 0.0
    %469 = vmatpush2.msra.mxu0 0.0
    %470 = vmatprep.subr.mxu0 0.0
    %471 = vmatpush2.msra.mxu0 0.0
    %472 = vmatprep.subr.mxu0 0.0
    %473 = vmatpush2.msra.mxu0 0.0
    %474 = vmatprep.subr.mxu0 0.0
    %475 = vmatpush2.msra.mxu0 0.0
    %476 = vmatprep.subr.mxu0 0.0
    %477 = vmatpush2.msra.mxu0 0.0
    %478 = vmatprep.mubr.f32.mxu0 0.0
    %479 = vmatmul.mubr.f32.gmra.mxu0 %v412
    %v480 = vpop.f32.mrf.mxu0
    %v481 = vadd.f32 0.0, %v480
    %v482 = vpop.f32.mrf.mxu0
    %483 = vdwg.mxu0
    %v484 = vadd.f32 %v165, %v481
    %v485 = vxor.u32 %v484, 2147483648
    %v486 = vmul.f32 %v485, 1.442695
    %v487 = vpow.pop %v486
    %v488 = vadd.f32 %v487, 1.0
    %v489 = vrcp.pop %v488
    %v490 = vmul.f32 1.0, %v489
    %v491 = vtanh.pop %v484
    %v492 = vmul.f32 %v490, %v395
    %494 = vrot.lane.b32.xlu0 %v491, 64
    %v495 = vpop.permute.xlu0 %494
    %v497 = vmul.f32 %v490, %v495
    %499 = vrot.lane.b32.xlu0 %v497, 32
    %v500 = vpop.permute.xlu0 %499
    %v502 = vadd.f32 %v492, %v500
    %v503 = vtanh.pop %v502
    %505 = vrot.lane.b32.xlu0 %v503, 64
    %v506 = vpop.permute.xlu0 %505
    %v508 = vmul.f32 %v490, %v506
    %v511 = vunpack.c.l.s4 1983009808
    %v512 = vunpack.c.0.s8 %v511
    %v513 = vlaneseq
    %v514 = vshrl.u32 %v513, 7
    %v515 = vsub.s32 %v512, %v514
    %v516 = vrot.slane %v508, %v515
    %517 = vrot.lane.b32.xlu0 %v516, 32
    %v518 = vpop.permute.xlu0 %517
    %v519 = vsel %vm67, %v518, 0
    %521 = vmatprep.subr.mxu0 0.0
    %522 = vmatpush1.msra.mxu0 0.0
    %523 = vmatprep.subr.mxu0 0.0
    %524 = vmatpush1.msra.mxu0 0.0
    %525 = vmatprep.subr.mxu0 0.0
    %526 = vmatpush1.msra.mxu0 0.0
    %527 = vmatprep.subr.mxu0 0.0
    %528 = vmatpush1.msra.mxu0 0.0
    %529 = vmatprep.subr.mxu0 0.0
    %530 = vmatpush1.msra.mxu0 0.0
    %531 = vmatprep.subr.mxu0 0.0
    %532 = vmatpush1.msra.mxu0 0.0
    %533 = vmatprep.subr.mxu0 0.0
    %534 = vmatpush1.msra.mxu0 0.0
    %535 = vmatprep.subr.mxu0 0.0
    %536 = vmatpush1.msra.mxu0 0.0
    %537 = vmatprep.subr.mxu0 0.0
    %538 = vmatpush1.msra.mxu0 0.0
    %539 = vmatprep.subr.mxu0 0.0
    %540 = vmatpush1.msra.mxu0 0.0
    %541 = vmatprep.subr.mxu0 0.0
    %542 = vmatpush1.msra.mxu0 0.0
    %543 = vmatprep.subr.mxu0 0.0
    %544 = vmatpush1.msra.mxu0 0.0
    %545 = vmatprep.subr.mxu0 0.0
    %546 = vmatpush1.msra.mxu0 %v196
    %547 = vmatprep.subr.mxu0 0.0
    %548 = vmatpush1.msra.mxu0 %v195
    %549 = vmatprep.subr.mxu0 0.0
    %550 = vmatpush1.msra.mxu0 %v194
    %551 = vmatprep.subr.mxu0 0.0
    %552 = vmatpush1.msra.mxu0 %v193
    %553 = vmatprep.subr.mxu0 0.0
    %554 = vmatpush2.msra.mxu0 0.0
    %555 = vmatprep.subr.mxu0 0.0
    %556 = vmatpush2.msra.mxu0 0.0
    %557 = vmatprep.subr.mxu0 0.0
    %558 = vmatpush2.msra.mxu0 0.0
    %559 = vmatprep.subr.mxu0 0.0
    %560 = vmatpush2.msra.mxu0 0.0
    %561 = vmatprep.subr.mxu0 0.0
    %562 = vmatpush2.msra.mxu0 0.0
    %563 = vmatprep.subr.mxu0 0.0
    %564 = vmatpush2.msra.mxu0 0.0
    %565 = vmatprep.subr.mxu0 0.0
    %566 = vmatpush2.msra.mxu0 0.0
    %567 = vmatprep.subr.mxu0 0.0
    %568 = vmatpush2.msra.mxu0 0.0
    %569 = vmatprep.subr.mxu0 0.0
    %570 = vmatpush2.msra.mxu0 0.0
    %571 = vmatprep.subr.mxu0 0.0
    %572 = vmatpush2.msra.mxu0 0.0
    %573 = vmatprep.subr.mxu0 0.0
    %574 = vmatpush2.msra.mxu0 0.0
    %575 = vmatprep.subr.mxu0 0.0
    %576 = vmatpush2.msra.mxu0 0.0
    %577 = vmatprep.subr.mxu0 0.0
    %578 = vmatpush2.msra.mxu0 0.0
    %579 = vmatprep.subr.mxu0 0.0
    %580 = vmatpush2.msra.mxu0 0.0
    %581 = vmatprep.subr.mxu0 0.0
    %582 = vmatpush2.msra.mxu0 0.0
    %583 = vmatprep.subr.mxu0 0.0
    %584 = vmatpush2.msra.mxu0 0.0
    %585 = vmatprep.mubr.f32.mxu0 0.0
    %586 = vmatmul.mubr.f32.gmra.mxu0 %v519
    %v587 = vpop.f32.mrf.mxu0
    %v588 = vadd.f32 0.0, %v587
    %v589 = vpop.f32.mrf.mxu0
    %590 = vdwg.mxu0
    %v591 = vadd.f32 %v167, %v588
    %v592 = vxor.u32 %v591, 2147483648
    %v593 = vmul.f32 %v592, 1.442695
    %v594 = vpow.pop %v593
    %v595 = vadd.f32 %v594, 1.0
    %v596 = vrcp.pop %v595
    %v597 = vmul.f32 1.0, %v596
    %v598 = vtanh.pop %v591
    %v599 = vmul.f32 %v597, %v502
    %601 = vrot.lane.b32.xlu0 %v598, 64
    %v602 = vpop.permute.xlu0 %601
    %v604 = vmul.f32 %v597, %v602
    %606 = vrot.lane.b32.xlu0 %v604, 32
    %v607 = vpop.permute.xlu0 %606
    %v609 = vadd.f32 %v599, %v607
    %v610 = vtanh.pop %v609
    %612 = vrot.lane.b32.xlu0 %v610, 64
    %v613 = vpop.permute.xlu0 %612
    %v615 = vmul.f32 %v597, %v613
    %v618 = vunpack.c.l.s4 1983009808
    %v619 = vunpack.c.0.s8 %v618
    %v620 = vlaneseq
    %v621 = vshrl.u32 %v620, 7
    %v622 = vsub.s32 %v619, %v621
    %v623 = vrot.slane %v615, %v622
    %624 = vrot.lane.b32.xlu0 %v623, 32
    %v625 = vpop.permute.xlu0 %624
    %v626 = vsel %vm67, %v625, 0
    %628 = vmatprep.subr.mxu0 0.0
    %629 = vmatpush1.msra.mxu0 0.0
    %630 = vmatprep.subr.mxu0 0.0
    %631 = vmatpush1.msra.mxu0 0.0
    %632 = vmatprep.subr.mxu0 0.0
    %633 = vmatpush1.msra.mxu0 0.0
    %634 = vmatprep.subr.mxu0 0.0
    %635 = vmatpush1.msra.mxu0 0.0
    %636 = vmatprep.subr.mxu0 0.0
    %637 = vmatpush1.msra.mxu0 0.0
    %638 = vmatprep.subr.mxu0 0.0
    %639 = vmatpush1.msra.mxu0 0.0
    %640 = vmatprep.subr.mxu0 0.0
    %641 = vmatpush1.msra.mxu0 0.0
    %642 = vmatprep.subr.mxu0 0.0
    %643 = vmatpush1.msra.mxu0 0.0
    %644 = vmatprep.subr.mxu0 0.0
    %645 = vmatpush1.msra.mxu0 0.0
    %646 = vmatprep.subr.mxu0 0.0
    %647 = vmatpush1.msra.mxu0 0.0
    %648 = vmatprep.subr.mxu0 0.0
    %649 = vmatpush1.msra.mxu0 0.0
    %650 = vmatprep.subr.mxu0 0.0
    %651 = vmatpush1.msra.mxu0 0.0
    %652 = vmatprep.subr.mxu0 0.0
    %653 = vmatpush1.msra.mxu0 %v196
    %654 = vmatprep.subr.mxu0 0.0
    %655 = vmatpush1.msra.mxu0 %v195
    %656 = vmatprep.subr.mxu0 0.0
    %657 = vmatpush1.msra.mxu0 %v194
    %658 = vmatprep.subr.mxu0 0.0
    %659 = vmatpush1.msra.mxu0 %v193
    %660 = vmatprep.subr.mxu0 0.0
    %661 = vmatpush2.msra.mxu0 0.0
    %662 = vmatprep.subr.mxu0 0.0
    %663 = vmatpush2.msra.mxu0 0.0
    %664 = vmatprep.subr.mxu0 0.0
    %665 = vmatpush2.msra.mxu0 0.0
    %666 = vmatprep.subr.mxu0 0.0
    %667 = vmatpush2.msra.mxu0 0.0
    %668 = vmatprep.subr.mxu0 0.0
    %669 = vmatpush2.msra.mxu0 0.0
    %670 = vmatprep.subr.mxu0 0.0
    %671 = vmatpush2.msra.mxu0 0.0
    %672 = vmatprep.subr.mxu0 0.0
    %673 = vmatpush2.msra.mxu0 0.0
    %674 = vmatprep.subr.mxu0 0.0
    %675 = vmatpush2.msra.mxu0 0.0
    %676 = vmatprep.subr.mxu0 0.0
    %677 = vmatpush2.msra.mxu0 0.0
    %678 = vmatprep.subr.mxu0 0.0
    %679 = vmatpush2.msra.mxu0 0.0
    %680 = vmatprep.subr.mxu0 0.0
    %681 = vmatpush2.msra.mxu0 0.0
    %682 = vmatprep.subr.mxu0 0.0
    %683 = vmatpush2.msra.mxu0 0.0
    %684 = vmatprep.subr.mxu0 0.0
    %685 = vmatpush2.msra.mxu0 0.0
    %686 = vmatprep.subr.mxu0 0.0
    %687 = vmatpush2.msra.mxu0 0.0
    %688 = vmatprep.subr.mxu0 0.0
    %689 = vmatpush2.msra.mxu0 0.0
    %690 = vmatprep.subr.mxu0 0.0
    %691 = vmatpush2.msra.mxu0 0.0
    %692 = vmatprep.mubr.f32.mxu0 0.0
    %693 = vmatmul.mubr.f32.gmra.mxu0 %v626
    %v694 = vpop.f32.mrf.mxu0
    %v695 = vadd.f32 0.0, %v694
    %v696 = vpop.f32.mrf.mxu0
    %697 = vdwg.mxu0
    %v698 = vadd.f32 %v175, %v695
    %v699 = vxor.u32 %v698, 2147483648
    %v700 = vmul.f32 %v699, 1.442695
    %v701 = vpow.pop %v700
    %v702 = vadd.f32 %v701, 1.0
    %v703 = vrcp.pop %v702
    %v704 = vmul.f32 1.0, %v703
    %v705 = vtanh.pop %v698
    %v706 = vmul.f32 %v704, %v609
    %708 = vrot.lane.b32.xlu0 %v705, 64
    %v709 = vpop.permute.xlu0 %708
    %v711 = vmul.f32 %v704, %v709
    %713 = vrot.lane.b32.xlu0 %v711, 32
    %v714 = vpop.permute.xlu0 %713
    %v716 = vadd.f32 %v706, %v714
    %v717 = vtanh.pop %v716
    %719 = vrot.lane.b32.xlu0 %v717, 64
    %v720 = vpop.permute.xlu0 %719
    %v722 = vmul.f32 %v704, %v720
    %v725 = vunpack.c.l.s4 1983009808
    %v726 = vunpack.c.0.s8 %v725
    %v727 = vlaneseq
    %v728 = vshrl.u32 %v727, 7
    %v729 = vsub.s32 %v726, %v728
    %v730 = vrot.slane %v722, %v729
    %731 = vrot.lane.b32.xlu0 %v730, 32
    %v732 = vpop.permute.xlu0 %731
    %v733 = vsel %vm67, %v732, 0
    %735 = vmatprep.subr.mxu0 0.0
    %736 = vmatpush1.msra.mxu0 0.0
    %737 = vmatprep.subr.mxu0 0.0
    %738 = vmatpush1.msra.mxu0 0.0
    %739 = vmatprep.subr.mxu0 0.0
    %740 = vmatpush1.msra.mxu0 0.0
    %741 = vmatprep.subr.mxu0 0.0
    %742 = vmatpush1.msra.mxu0 0.0
    %743 = vmatprep.subr.mxu0 0.0
    %744 = vmatpush1.msra.mxu0 0.0
    %745 = vmatprep.subr.mxu0 0.0
    %746 = vmatpush1.msra.mxu0 0.0
    %747 = vmatprep.subr.mxu0 0.0
    %748 = vmatpush1.msra.mxu0 0.0
    %749 = vmatprep.subr.mxu0 0.0
    %750 = vmatpush1.msra.mxu0 0.0
    %751 = vmatprep.subr.mxu0 0.0
    %752 = vmatpush1.msra.mxu0 0.0
    %753 = vmatprep.subr.mxu0 0.0
    %754 = vmatpush1.msra.mxu0 0.0
    %755 = vmatprep.subr.mxu0 0.0
    %756 = vmatpush1.msra.mxu0 0.0
    %757 = vmatprep.subr.mxu0 0.0
    %758 = vmatpush1.msra.mxu0 0.0
    %759 = vmatprep.subr.mxu0 0.0
    %760 = vmatpush1.msra.mxu0 %v196
    %761 = vmatprep.subr.mxu0 0.0
    %762 = vmatpush1.msra.mxu0 %v195
    %763 = vmatprep.subr.mxu0 0.0
    %764 = vmatpush1.msra.mxu0 %v194
    %765 = vmatprep.subr.mxu0 0.0
    %766 = vmatpush1.msra.mxu0 %v193
    %767 = vmatprep.subr.mxu0 0.0
    %768 = vmatpush2.msra.mxu0 0.0
    %769 = vmatprep.subr.mxu0 0.0
    %770 = vmatpush2.msra.mxu0 0.0
    %771 = vmatprep.subr.mxu0 0.0
    %772 = vmatpush2.msra.mxu0 0.0
    %773 = vmatprep.subr.mxu0 0.0
    %774 = vmatpush2.msra.mxu0 0.0
    %775 = vmatprep.subr.mxu0 0.0
    %776 = vmatpush2.msra.mxu0 0.0
    %777 = vmatprep.subr.mxu0 0.0
    %778 = vmatpush2.msra.mxu0 0.0
    %779 = vmatprep.subr.mxu0 0.0
    %780 = vmatpush2.msra.mxu0 0.0
    %781 = vmatprep.subr.mxu0 0.0
    %782 = vmatpush2.msra.mxu0 0.0
    %783 = vmatprep.subr.mxu0 0.0
    %784 = vmatpush2.msra.mxu0 0.0
    %785 = vmatprep.subr.mxu0 0.0
    %786 = vmatpush2.msra.mxu0 0.0
    %787 = vmatprep.subr.mxu0 0.0
    %788 = vmatpush2.msra.mxu0 0.0
    %789 = vmatprep.subr.mxu0 0.0
    %790 = vmatpush2.msra.mxu0 0.0
    %791 = vmatprep.subr.mxu0 0.0
    %792 = vmatpush2.msra.mxu0 0.0
    %793 = vmatprep.subr.mxu0 0.0
    %794 = vmatpush2.msra.mxu0 0.0
    %795 = vmatprep.subr.mxu0 0.0
    %796 = vmatpush2.msra.mxu0 0.0
    %797 = vmatprep.subr.mxu0 0.0
    %798 = vmatpush2.msra.mxu0 0.0
    %799 = vmatprep.mubr.f32.mxu0 0.0
    %800 = vmatmul.mubr.f32.gmra.mxu0 %v733
    %v801 = vpop.f32.mrf.mxu0
    %v802 = vadd.f32 0.0, %v801
    %v803 = vpop.f32.mrf.mxu0
    %804 = vdwg.mxu0
    %v805 = vadd.f32 %v183, %v802
    %v806 = vxor.u32 %v805, 2147483648
    %v807 = vmul.f32 %v806, 1.442695
    %v808 = vpow.pop %v807
    %v809 = vadd.f32 %v808, 1.0
    %v810 = vrcp.pop %v809
    %v811 = vmul.f32 1.0, %v810
    %v812 = vtanh.pop %v805
    %v813 = vmul.f32 %v811, %v716
    %815 = vrot.lane.b32.xlu0 %v812, 64
    %v816 = vpop.permute.xlu0 %815
    %v818 = vmul.f32 %v811, %v816
    %820 = vrot.lane.b32.xlu0 %v818, 32
    %v821 = vpop.permute.xlu0 %820
    %v823 = vadd.f32 %v813, %v821
    %v824 = vtanh.pop %v823
    %826 = vrot.lane.b32.xlu0 %v824, 64
    %v827 = vpop.permute.xlu0 %826
    %v829 = vmul.f32 %v811, %v827
    %v832 = vunpack.c.l.s4 1983009808
    %v833 = vunpack.c.0.s8 %v832
    %v834 = vlaneseq
    %v835 = vshrl.u32 %v834, 7
    %v836 = vsub.s32 %v833, %v835
    %v837 = vrot.slane %v829, %v836
    %838 = vrot.lane.b32.xlu0 %v837, 32
    %v839 = vpop.permute.xlu0 %838
    %v840 = vsel %vm67, %v839, 0
    %842 = vmatprep.subr.mxu0 0.0
    %843 = vmatpush1.msra.mxu0 0.0
    %844 = vmatprep.subr.mxu0 0.0
    %845 = vmatpush1.msra.mxu0 0.0
    %846 = vmatprep.subr.mxu0 0.0
    %847 = vmatpush1.msra.mxu0 0.0
    %848 = vmatprep.subr.mxu0 0.0
    %849 = vmatpush1.msra.mxu0 0.0
    %850 = vmatprep.subr.mxu0 0.0
    %851 = vmatpush1.msra.mxu0 0.0
    %852 = vmatprep.subr.mxu0 0.0
    %853 = vmatpush1.msra.mxu0 0.0
    %854 = vmatprep.subr.mxu0 0.0
    %855 = vmatpush1.msra.mxu0 0.0
    %856 = vmatprep.subr.mxu0 0.0
    %857 = vmatpush1.msra.mxu0 0.0
    %858 = vmatprep.subr.mxu0 0.0
    %859 = vmatpush1.msra.mxu0 0.0
    %860 = vmatprep.subr.mxu0 0.0
    %861 = vmatpush1.msra.mxu0 0.0
    %862 = vmatprep.subr.mxu0 0.0
    %863 = vmatpush1.msra.mxu0 0.0
    %864 = vmatprep.subr.mxu0 0.0
    %865 = vmatpush1.msra.mxu0 0.0
    %866 = vmatprep.subr.mxu0 0.0
    %867 = vmatpush1.msra.mxu0 %v196
    %868 = vmatprep.subr.mxu0 0.0
    %869 = vmatpush1.msra.mxu0 %v195
    %870 = vmatprep.subr.mxu0 0.0
    %871 = vmatpush1.msra.mxu0 %v194
    %872 = vmatprep.subr.mxu0 0.0
    %873 = vmatpush1.msra.mxu0 %v193
    %874 = vmatprep.subr.mxu0 0.0
    %875 = vmatpush2.msra.mxu0 0.0
    %876 = vmatprep.subr.mxu0 0.0
    %877 = vmatpush2.msra.mxu0 0.0
    %878 = vmatprep.subr.mxu0 0.0
    %879 = vmatpush2.msra.mxu0 0.0
    %880 = vmatprep.subr.mxu0 0.0
    %881 = vmatpush2.msra.mxu0 0.0
    %882 = vmatprep.subr.mxu0 0.0
    %883 = vmatpush2.msra.mxu0 0.0
    %884 = vmatprep.subr.mxu0 0.0
    %885 = vmatpush2.msra.mxu0 0.0
    %886 = vmatprep.subr.mxu0 0.0
    %887 = vmatpush2.msra.mxu0 0.0
    %888 = vmatprep.subr.mxu0 0.0
    %889 = vmatpush2.msra.mxu0 0.0
    %890 = vmatprep.subr.mxu0 0.0
    %891 = vmatpush2.msra.mxu0 0.0
    %892 = vmatprep.subr.mxu0 0.0
    %893 = vmatpush2.msra.mxu0 0.0
    %894 = vmatprep.subr.mxu0 0.0
    %895 = vmatpush2.msra.mxu0 0.0
    %896 = vmatprep.subr.mxu0 0.0
    %897 = vmatpush2.msra.mxu0 0.0
    %898 = vmatprep.subr.mxu0 0.0
    %899 = vmatpush2.msra.mxu0 0.0
    %900 = vmatprep.subr.mxu0 0.0
    %901 = vmatpush2.msra.mxu0 0.0
    %902 = vmatprep.subr.mxu0 0.0
    %903 = vmatpush2.msra.mxu0 0.0
    %904 = vmatprep.subr.mxu0 0.0
    %905 = vmatpush2.msra.mxu0 0.0
    %906 = vmatprep.mubr.f32.mxu0 0.0
    %907 = vmatmul.mubr.f32.gmra.mxu0 %v840
    %v908 = vpop.f32.mrf.mxu0
    %v909 = vadd.f32 0.0, %v908
    %v910 = vpop.f32.mrf.mxu0
    %911 = vdwg.mxu0
    %v912 = vadd.f32 %v182, %v909
    %v913 = vxor.u32 %v912, 2147483648
    %v914 = vmul.f32 %v913, 1.442695
    %v915 = vpow.pop %v914
    %v916 = vadd.f32 %v915, 1.0
    %v917 = vrcp.pop %v916
    %v918 = vmul.f32 1.0, %v917
    %v919 = vtanh.pop %v912
    %v920 = vmul.f32 %v918, %v823
    %922 = vrot.lane.b32.xlu0 %v919, 64
    %v923 = vpop.permute.xlu0 %922
    %v925 = vmul.f32 %v918, %v923
    %927 = vrot.lane.b32.xlu0 %v925, 32
    %v928 = vpop.permute.xlu0 %927
    %v930 = vadd.f32 %v920, %v928
    %v931 = vtanh.pop %v930
    %933 = vrot.lane.b32.xlu0 %v931, 64
    %v934 = vpop.permute.xlu0 %933
    %v936 = vmul.f32 %v918, %v934
    %v939 = vunpack.c.l.s4 1983009808
    %v940 = vunpack.c.0.s8 %v939
    %v941 = vlaneseq
    %v942 = vshrl.u32 %v941, 7
    %v943 = vsub.s32 %v940, %v942
    %v944 = vrot.slane %v936, %v943
    %945 = vrot.lane.b32.xlu0 %v944, 32
    %v946 = vpop.permute.xlu0 %945
    %v947 = vsel %vm67, %v946, 0
    %949 = vmatprep.subr.mxu0 0.0
    %950 = vmatpush1.msra.mxu0 0.0
    %951 = vmatprep.subr.mxu0 0.0
    %952 = vmatpush1.msra.mxu0 0.0
    %953 = vmatprep.subr.mxu0 0.0
    %954 = vmatpush1.msra.mxu0 0.0
    %955 = vmatprep.subr.mxu0 0.0
    %956 = vmatpush1.msra.mxu0 0.0
    %957 = vmatprep.subr.mxu0 0.0
    %958 = vmatpush1.msra.mxu0 0.0
    %959 = vmatprep.subr.mxu0 0.0
    %960 = vmatpush1.msra.mxu0 0.0
    %961 = vmatprep.subr.mxu0 0.0
    %962 = vmatpush1.msra.mxu0 0.0
    %963 = vmatprep.subr.mxu0 0.0
    %964 = vmatpush1.msra.mxu0 0.0
    %965 = vmatprep.subr.mxu0 0.0
    %966 = vmatpush1.msra.mxu0 0.0
    %967 = vmatprep.subr.mxu0 0.0
    %968 = vmatpush1.msra.mxu0 0.0
    %969 = vmatprep.subr.mxu0 0.0
    %970 = vmatpush1.msra.mxu0 0.0
    %971 = vmatprep.subr.mxu0 0.0
    %972 = vmatpush1.msra.mxu0 0.0
    %973 = vmatprep.subr.mxu0 0.0
    %974 = vmatpush1.msra.mxu0 %v196
    %975 = vmatprep.subr.mxu0 0.0
    %976 = vmatpush1.msra.mxu0 %v195
    %977 = vmatprep.subr.mxu0 0.0
    %978 = vmatpush1.msra.mxu0 %v194
    %979 = vmatprep.subr.mxu0 0.0
    %980 = vmatpush1.msra.mxu0 %v193
    %981 = vmatprep.subr.mxu0 0.0
    %982 = vmatpush2.msra.mxu0 0.0
    %983 = vmatprep.subr.mxu0 0.0
    %984 = vmatpush2.msra.mxu0 0.0
    %985 = vmatprep.subr.mxu0 0.0
    %986 = vmatpush2.msra.mxu0 0.0
    %987 = vmatprep.subr.mxu0 0.0
    %988 = vmatpush2.msra.mxu0 0.0
    %989 = vmatprep.subr.mxu0 0.0
    %990 = vmatpush2.msra.mxu0 0.0
    %991 = vmatprep.subr.mxu0 0.0
    %992 = vmatpush2.msra.mxu0 0.0
    %993 = vmatprep.subr.mxu0 0.0
    %994 = vmatpush2.msra.mxu0 0.0
    %995 = vmatprep.subr.mxu0 0.0
    %996 = vmatpush2.msra.mxu0 0.0
    %997 = vmatprep.subr.mxu0 0.0
    %998 = vmatpush2.msra.mxu0 0.0
    %999 = vmatprep.subr.mxu0 0.0
    %1000 = vmatpush2.msra.mxu0 0.0
    %1001 = vmatprep.subr.mxu0 0.0
    %1002 = vmatpush2.msra.mxu0 0.0
    %1003 = vmatprep.subr.mxu0 0.0
    %1004 = vmatpush2.msra.mxu0 0.0
    %1005 = vmatprep.subr.mxu0 0.0
    %1006 = vmatpush2.msra.mxu0 0.0
    %1007 = vmatprep.subr.mxu0 0.0
    %1008 = vmatpush2.msra.mxu0 0.0
    %1009 = vmatprep.subr.mxu0 0.0
    %1010 = vmatpush2.msra.mxu0 0.0
    %1011 = vmatprep.subr.mxu0 0.0
    %1012 = vmatpush2.msra.mxu0 0.0
    %1013 = vmatprep.mubr.f32.mxu0 0.0
    %1014 = vmatmul.mubr.f32.gmra.mxu0 %v947
    %v1015 = vpop.f32.mrf.mxu0
    %v1016 = vadd.f32 0.0, %v1015
    %v1017 = vpop.f32.mrf.mxu0
    %1018 = vdwg.mxu0
    %v1019 = vadd.f32 %v184, %v1016
    %v1020 = vxor.u32 %v1019, 2147483648
    %v1021 = vmul.f32 %v1020, 1.442695
    %v1022 = vpow.pop %v1021
    %v1023 = vadd.f32 %v1022, 1.0
    %v1024 = vrcp.pop %v1023
    %v1025 = vmul.f32 1.0, %v1024
    %v1026 = vtanh.pop %v1019
    %v1027 = vmul.f32 %v1025, %v930
    %1029 = vrot.lane.b32.xlu0 %v1026, 64
    %v1030 = vpop.permute.xlu0 %1029
    %v1032 = vmul.f32 %v1025, %v1030
    %1034 = vrot.lane.b32.xlu0 %v1032, 32
    %v1035 = vpop.permute.xlu0 %1034
    %v1037 = vadd.f32 %v1027, %v1035
    %v1038 = vtanh.pop %v1037
    %1040 = vrot.lane.b32.xlu0 %v1038, 64
    %v1041 = vpop.permute.xlu0 %1040
    %v1043 = vmul.f32 %v1025, %v1041
    %v1044 = vld [vmem:[%s4] sm:$0x3]
    %1046 = vset.pattern.permute.xlu0 0
    %1047 = vperm.xlu0 %1046, %v1044
    %v1048 = vpop.permute.xlu0 %1047
    %v1050 = vmul.f32 %v1043, %v1048
    %v1051 = vld [vmem:[%s6] sm:$0xff]
    %v1052 = vld [vmem:[%s6 + $0x8] sm:$0xff]
    %v1053 = vld [vmem:[%s6 + $0x10] sm:$0xff]
    %v1054 = vld [vmem:[%s6 + $0x18] sm:$0xff]
    %v1055 = vld [vmem:[%s5] sm:$0x3]
    %v1056 = vld [vmem:[%s7] sm:$0xff]
    %v1057 = vld [vmem:[%s7 + $0x8] sm:$0xff]
    %v1058 = vld [vmem:[%s7 + $0x10] sm:$0xff]
    %v1059 = vld [vmem:[%s7 + $0x18] sm:$0xff]
    %v1061 = vsel %vm67, %v1055, 0
    %1063 = vmatprep.subr.mxu0 0.0
    %1064 = vmatpush1.msra.mxu0 0.0
    %1065 = vmatprep.subr.mxu0 0.0
    %1066 = vmatpush1.msra.mxu0 0.0
    %1067 = vmatprep.subr.mxu0 0.0
    %1068 = vmatpush1.msra.mxu0 0.0
    %1069 = vmatprep.subr.mxu0 0.0
    %1070 = vmatpush1.msra.mxu0 0.0
    %1071 = vmatprep.subr.mxu0 0.0
    %1072 = vmatpush1.msra.mxu0 0.0
    %1073 = vmatprep.subr.mxu0 0.0
    %1074 = vmatpush1.msra.mxu0 0.0
    %1075 = vmatprep.subr.mxu0 0.0
    %1076 = vmatpush1.msra.mxu0 0.0
    %1077 = vmatprep.subr.mxu0 0.0
    %1078 = vmatpush1.msra.mxu0 0.0
    %1079 = vmatprep.subr.mxu0 0.0
    %1080 = vmatpush1.msra.mxu0 0.0
    %1081 = vmatprep.subr.mxu0 0.0
    %1082 = vmatpush1.msra.mxu0 0.0
    %1083 = vmatprep.subr.mxu0 0.0
    %1084 = vmatpush1.msra.mxu0 0.0
    %1085 = vmatprep.subr.mxu0 0.0
    %1086 = vmatpush1.msra.mxu0 0.0
    %1087 = vmatprep.subr.mxu0 0.0
    %1088 = vmatpush1.msra.mxu0 %v1059
    %1089 = vmatprep.subr.mxu0 0.0
    %1090 = vmatpush1.msra.mxu0 %v1058
    %1091 = vmatprep.subr.mxu0 0.0
    %1092 = vmatpush1.msra.mxu0 %v1057
    %1093 = vmatprep.subr.mxu0 0.0
    %1094 = vmatpush1.msra.mxu0 %v1056
    %1095 = vmatprep.subr.mxu0 0.0
    %1096 = vmatpush2.msra.mxu0 0.0
    %1097 = vmatprep.subr.mxu0 0.0
    %1098 = vmatpush2.msra.mxu0 0.0
    %1099 = vmatprep.subr.mxu0 0.0
    %1100 = vmatpush2.msra.mxu0 0.0
    %1101 = vmatprep.subr.mxu0 0.0
    %1102 = vmatpush2.msra.mxu0 0.0
    %1103 = vmatprep.subr.mxu0 0.0
    %1104 = vmatpush2.msra.mxu0 0.0
    %1105 = vmatprep.subr.mxu0 0.0
    %1106 = vmatpush2.msra.mxu0 0.0
    %1107 = vmatprep.subr.mxu0 0.0
    %1108 = vmatpush2.msra.mxu0 0.0
    %1109 = vmatprep.subr.mxu0 0.0
    %1110 = vmatpush2.msra.mxu0 0.0
    %1111 = vmatprep.subr.mxu0 0.0
    %1112 = vmatpush2.msra.mxu0 0.0
    %1113 = vmatprep.subr.mxu0 0.0
    %1114 = vmatpush2.msra.mxu0 0.0
    %1115 = vmatprep.subr.mxu0 0.0
    %1116 = vmatpush2.msra.mxu0 0.0
    %1117 = vmatprep.subr.mxu0 0.0
    %1118 = vmatpush2.msra.mxu0 0.0
    %1119 = vmatprep.subr.mxu0 0.0
    %1120 = vmatpush2.msra.mxu0 0.0
    %1121 = vmatprep.subr.mxu0 0.0
    %1122 = vmatpush2.msra.mxu0 0.0
    %1123 = vmatprep.subr.mxu0 0.0
    %1124 = vmatpush2.msra.mxu0 0.0
    %1125 = vmatprep.subr.mxu0 0.0
    %1126 = vmatpush2.msra.mxu0 0.0
    %1127 = vmatprep.mubr.f32.mxu0 0.0
    %1128 = vmatmul.mubr.f32.gmra.mxu0 %v1061
    %v1129 = vpop.f32.mrf.mxu0
    %v1130 = vadd.f32 0.0, %v1129
    %v1131 = vpop.f32.mrf.mxu0
    %1132 = vdwg.mxu0
    %v1135 = vunpack.c.l.s4 1983009808
    %v1136 = vunpack.c.0.s8 %v1135
    %v1137 = vlaneseq
    %v1138 = vshrl.u32 %v1137, 7
    %v1139 = vsub.s32 %v1136, %v1138
    %v1140 = vrot.slane %v1050, %v1139
    %1141 = vrot.lane.b32.xlu0 %v1140, 32
    %v1142 = vpop.permute.xlu0 %1141
    %v1143 = vsel %vm67, %v1142, 0
    %1145 = vmatprep.subr.mxu0 0.0
    %1146 = vmatpush1.msra.mxu0 0.0
    %1147 = vmatprep.subr.mxu0 0.0
    %1148 = vmatpush1.msra.mxu0 0.0
    %1149 = vmatprep.subr.mxu0 0.0
    %1150 = vmatpush1.msra.mxu0 0.0
    %1151 = vmatprep.subr.mxu0 0.0
    %1152 = vmatpush1.msra.mxu0 0.0
    %1153 = vmatprep.subr.mxu0 0.0
    %1154 = vmatpush1.msra.mxu0 0.0
    %1155 = vmatprep.subr.mxu0 0.0
    %1156 = vmatpush1.msra.mxu0 0.0
    %1157 = vmatprep.subr.mxu0 0.0
    %1158 = vmatpush1.msra.mxu0 0.0
    %1159 = vmatprep.subr.mxu0 0.0
    %1160 = vmatpush1.msra.mxu0 0.0
    %1161 = vmatprep.subr.mxu0 0.0
    %1162 = vmatpush1.msra.mxu0 0.0
    %1163 = vmatprep.subr.mxu0 0.0
    %1164 = vmatpush1.msra.mxu0 0.0
    %1165 = vmatprep.subr.mxu0 0.0
    %1166 = vmatpush1.msra.mxu0 0.0
    %1167 = vmatprep.subr.mxu0 0.0
    %1168 = vmatpush1.msra.mxu0 0.0
    %1169 = vmatprep.subr.mxu0 0.0
    %1170 = vmatpush1.msra.mxu0 %v1054
    %1171 = vmatprep.subr.mxu0 0.0
    %1172 = vmatpush1.msra.mxu0 %v1053
    %1173 = vmatprep.subr.mxu0 0.0
    %1174 = vmatpush1.msra.mxu0 %v1052
    %1175 = vmatprep.subr.mxu0 0.0
    %1176 = vmatpush1.msra.mxu0 %v1051
    %1177 = vmatprep.subr.mxu0 0.0
    %1178 = vmatpush2.msra.mxu0 0.0
    %1179 = vmatprep.subr.mxu0 0.0
    %1180 = vmatpush2.msra.mxu0 0.0
    %1181 = vmatprep.subr.mxu0 0.0
    %1182 = vmatpush2.msra.mxu0 0.0
    %1183 = vmatprep.subr.mxu0 0.0
    %1184 = vmatpush2.msra.mxu0 0.0
    %1185 = vmatprep.subr.mxu0 0.0
    %1186 = vmatpush2.msra.mxu0 0.0
    %1187 = vmatprep.subr.mxu0 0.0
    %1188 = vmatpush2.msra.mxu0 0.0
    %1189 = vmatprep.subr.mxu0 0.0
    %1190 = vmatpush2.msra.mxu0 0.0
    %1191 = vmatprep.subr.mxu0 0.0
    %1192 = vmatpush2.msra.mxu0 0.0
    %1193 = vmatprep.subr.mxu0 0.0
    %1194 = vmatpush2.msra.mxu0 0.0
    %1195 = vmatprep.subr.mxu0 0.0
    %1196 = vmatpush2.msra.mxu0 0.0
    %1197 = vmatprep.subr.mxu0 0.0
    %1198 = vmatpush2.msra.mxu0 0.0
    %1199 = vmatprep.subr.mxu0 0.0
    %1200 = vmatpush2.msra.mxu0 0.0
    %1201 = vmatprep.subr.mxu0 0.0
    %1202 = vmatpush2.msra.mxu0 0.0
    %1203 = vmatprep.subr.mxu0 0.0
    %1204 = vmatpush2.msra.mxu0 0.0
    %1205 = vmatprep.subr.mxu0 0.0
    %1206 = vmatpush2.msra.mxu0 0.0
    %1207 = vmatprep.subr.mxu0 0.0
    %1208 = vmatpush2.msra.mxu0 0.0
    %1209 = vmatprep.mubr.f32.mxu0 0.0
    %1210 = vmatmul.mubr.f32.gmra.mxu0 %v1143
    %v1211 = vpop.f32.mrf.mxu0
    %v1212 = vadd.f32 %v1130, %v1211
    %v1213 = vpop.f32.mrf.mxu0
    %1214 = vdwg.mxu0
    %v1215 = vld [vmem:[%s8] sm:$0x1]
    %v1217 = vlaneseq
    %v1218 = vshrl.u32 %v1217, 7
    %v1219 = vsub.s32 0, %v1218
    %v1220 = vrot.slane %v1215, %v1219
    %v1222 = vadd.f32 %v1212, %v1220
    %v1223 = vmax.f32 %v1222, 0.0
    %v1224 = vld [vmem:[%s9] sm:$0xff]
    %v1225 = vld [vmem:[%s9 + $0x8] sm:$0xff]
    %v1226 = vld [vmem:[%s9 + $0x10] sm:$0xff]
    %v1227 = vld [vmem:[%s9 + $0x18] sm:$0xff]
    %v1228 = vld [vmem:[%s9 + $0x20] sm:$0xff]
    %v1229 = vld [vmem:[%s9 + $0x28] sm:$0xff]
    %v1230 = vld [vmem:[%s9 + $0x30] sm:$0xff]
    %v1231 = vld [vmem:[%s9 + $0x38] sm:$0xff]
    %v1232 = vld [vmem:[%s9 + $0x40] sm:$0xff]
    %v1233 = vld [vmem:[%s9 + $0x48] sm:$0xff]
    %v1234 = vld [vmem:[%s9 + $0x50] sm:$0xff]
    %v1235 = vld [vmem:[%s9 + $0x58] sm:$0xff]
    %v1236 = vld [vmem:[%s9 + $0x60] sm:$0xff]
    %v1237 = vld [vmem:[%s9 + $0x68] sm:$0xff]
    %v1238 = vld [vmem:[%s9 + $0x70] sm:$0xff]
    %v1239 = vld [vmem:[%s9 + $0x78] sm:$0xff]
    %v1240 = vld [vmem:[#allocation2] sm:$0x1]
    %v1242 = vlaneseq
    %v1243 = vshrl.u32 %v1242, 7
    %v1244 = vsub.s32 0, %v1243
    %v1245 = vrot.slane %v1240, %v1244
    %1247 = vmatprep.subr.mxu0 0.0
    %1248 = vmatpush1.msra.mxu0 %v1239
    %1249 = vmatprep.subr.mxu0 0.0
    %1250 = vmatpush1.msra.mxu0 %v1238
    %1251 = vmatprep.subr.mxu0 0.0
    %1252 = vmatpush1.msra.mxu0 %v1237
    %1253 = vmatprep.subr.mxu0 0.0
    %1254 = vmatpush1.msra.mxu0 %v1236
    %1255 = vmatprep.subr.mxu0 0.0
    %1256 = vmatpush1.msra.mxu0 %v1235
    %1257 = vmatprep.subr.mxu0 0.0
    %1258 = vmatpush1.msra.mxu0 %v1234
    %1259 = vmatprep.subr.mxu0 0.0
    %1260 = vmatpush1.msra.mxu0 %v1233
    %1261 = vmatprep.subr.mxu0 0.0
    %1262 = vmatpush1.msra.mxu0 %v1232
    %1263 = vmatprep.subr.mxu0 0.0
    %1264 = vmatpush1.msra.mxu0 %v1231
    %1265 = vmatprep.subr.mxu0 0.0
    %1266 = vmatpush1.msra.mxu0 %v1230
    %1267 = vmatprep.subr.mxu0 0.0
    %1268 = vmatpush1.msra.mxu0 %v1229
    %1269 = vmatprep.subr.mxu0 0.0
    %1270 = vmatpush1.msra.mxu0 %v1228
    %1271 = vmatprep.subr.mxu0 0.0
    %1272 = vmatpush1.msra.mxu0 %v1227
    %1273 = vmatprep.subr.mxu0 0.0
    %1274 = vmatpush1.msra.mxu0 %v1226
    %1275 = vmatprep.subr.mxu0 0.0
    %1276 = vmatpush1.msra.mxu0 %v1225
    %1277 = vmatprep.subr.mxu0 0.0
    %1278 = vmatpush1.msra.mxu0 %v1224
    %1279 = vmatprep.subr.mxu0 0.0
    %1280 = vmatpush2.msra.mxu0 0.0
    %1281 = vmatprep.subr.mxu0 0.0
    %1282 = vmatpush2.msra.mxu0 0.0
    %1283 = vmatprep.subr.mxu0 0.0
    %1284 = vmatpush2.msra.mxu0 0.0
    %1285 = vmatprep.subr.mxu0 0.0
    %1286 = vmatpush2.msra.mxu0 0.0
    %1287 = vmatprep.subr.mxu0 0.0
    %1288 = vmatpush2.msra.mxu0 0.0
    %1289 = vmatprep.subr.mxu0 0.0
    %1290 = vmatpush2.msra.mxu0 0.0
    %1291 = vmatprep.subr.mxu0 0.0
    %1292 = vmatpush2.msra.mxu0 0.0
    %1293 = vmatprep.subr.mxu0 0.0
    %1294 = vmatpush2.msra.mxu0 0.0
    %1295 = vmatprep.subr.mxu0 0.0
    %1296 = vmatpush2.msra.mxu0 0.0
    %1297 = vmatprep.subr.mxu0 0.0
    %1298 = vmatpush2.msra.mxu0 0.0
    %1299 = vmatprep.subr.mxu0 0.0
    %1300 = vmatpush2.msra.mxu0 0.0
    %1301 = vmatprep.subr.mxu0 0.0
    %1302 = vmatpush2.msra.mxu0 0.0
    %1303 = vmatprep.subr.mxu0 0.0
    %1304 = vmatpush2.msra.mxu0 0.0
    %1305 = vmatprep.subr.mxu0 0.0
    %1306 = vmatpush2.msra.mxu0 0.0
    %1307 = vmatprep.subr.mxu0 0.0
    %1308 = vmatpush2.msra.mxu0 0.0
    %1309 = vmatprep.subr.mxu0 0.0
    %1310 = vmatpush2.msra.mxu0 0.0
    %1311 = vmatprep.mubr.f32.mxu0 0.0
    %1312 = vmatmul.mubr.f32.gmra.mxu0 %v1223
    %v1313 = vpop.f32.mrf.mxu0
    %v1314 = vadd.f32 %v1245, %v1313
    %v1315 = vpop.f32.mrf.mxu0
    %1316 = vdwg.mxu0
    %v1317 = vxor.u32 %v1314, 2147483648
    %v1318 = vmul.f32 %v1317, 1.442695
    %v1319 = vpow.pop %v1318
    %v1320 = vadd.f32 %v1319, 1.0
    %v1321 = vrcp.pop %v1320
    %v1322 = vmul.f32 1.0, %v1321
    %vm1323 = vcmask 1024
    %1324 = vst.msk [vmem:[%s11] sm:$0x3] %vm1323, %v1322
    // Predicated region
    $region50: #{tpu_custom_call.1} parent=1 // pred_check
      _
    $region51: #{tpu_custom_call.1} parent=1 // pred_check_branch
      %1326 = sbr.rel (0) target = $region53
    $region52: #{tpu_custom_call.1} parent=1 // pred_region
      _
    $region53: #{tpu_custom_call.1} parent=1 // pred_fallthru
      _
    // Predicated region
    $region54: #{tpu_custom_call.1} parent=1 // pred_check
      _
    $region55: #{tpu_custom_call.1} parent=1 // pred_check_branch
      %1328 = sbr.rel (0) target = $region57
    $region56: #{tpu_custom_call.1} parent=1 // pred_region
      _
    $region57: #{tpu_custom_call.1} parent=1 // pred_fallthru
      _
    %1329 = vsyncpa [#allocation4], 1

</llo_original>
